<compile_context>
chip_gen: v7x
topology: tpu7x:2x2x1
jax: 0.10.0
libtpu: 0.0.40
codegen_flags: <defaults>
</compile_context>

<pallas_src>
import functools

import jax
import jax.numpy as jnp
from jax.experimental import pallas as pl
from jax.experimental.pallas import tpu as pltpu

# Small, module-consistent synthetic sizes (real module: n_embed=384, block_size=512).
N_EMBED = 32
NUM_HEADS = 4
HEAD_SIZE = N_EMBED // NUM_HEADS
BATCH = 2
SEQ = 8  # T (<= block_size; causal tril mask applied over T x T)


def _mhca_kernel(x_ref, inp_ref, wkv_ref, wq_ref, wp_ref, bp_ref, o_ref, kv_ref,
                 *, seq, tq, heads, hsp):
    """One (batch, query-tile) grid step.

    x_ref   : (1, T,  C)   bf16  encoder features (K/V source), full sequence
    inp_ref : (1, TQ, C)   bf16  decoder features (Q source), one query tile
    wkv_ref : (C, 2*Cp)    bf16  fused, head-padded [Wk | Wv]
    wq_ref  : (C, Cp)      bf16  head-padded Wq with C**-0.5 pre-folded
    wp_ref  : (Cp, C)      bf16  head-padded output projection
    bp_ref  : (1, C)       f32   output projection bias
    o_ref   : (1, TQ, C)   f32   output tile
    kv_ref  : (T, 2*Cp)    bf16  VMEM scratch, persists across the query axis
    """
    qi = pl.program_id(1)
    T = seq
    Cp = heads * hsp

    # K/V projection once per batch element (query axis is the inner,
    # "arbitrary" grid axis, so the scratch stays valid for qi > 0).
    @pl.when(qi == 0)
    def _():
        kv = jnp.dot(x_ref[0], wkv_ref[...], preferred_element_type=jnp.float32)
        kv_ref[...] = kv.astype(jnp.bfloat16)

    # Q projection for this query tile; attention scale already folded into Wq.
    q = jnp.dot(inp_ref[0], wq_ref[...],
                preferred_element_type=jnp.float32).astype(jnp.bfloat16)   # (TQ, Cp)

    # Per-tile additive causal bias (finite large negative, no -inf arithmetic).
    row = qi * tq + jax.lax.broadcasted_iota(jnp.int32, (tq, T), 0)
    col = jax.lax.broadcasted_iota(jnp.int32, (tq, T), 1)
    mask_bias = jnp.where(col <= row, 0.0, -1e30).astype(jnp.float32)      # (TQ, T)

    outs = []
    for h in range(heads):                          # short static head loop
        qs = slice(h * hsp, (h + 1) * hsp)          # lane-aligned (hsp % 128 == 0)
        vs = slice(Cp + h * hsp, Cp + (h + 1) * hsp)
        k_h = kv_ref[:, qs]                         # (T, hsp) bf16
        v_h = kv_ref[:, vs]                         # (T, hsp) bf16

        wei = jax.lax.dot_general(q[:, qs], k_h, (((1,), (1,)), ((), ())),
                                  preferred_element_type=jnp.float32)      # (TQ, T) f32
        wei = wei + mask_bias
        wei = wei - jnp.max(wei, axis=-1, keepdims=True)
        p = jnp.exp(wei)                            # f32, unnormalized
        rowsum = jnp.sum(p, axis=-1, keepdims=True)
        # dropout on attention weights / after the projection is identity in eval mode
        oh = jnp.dot(p.astype(jnp.bfloat16), v_h,
                     preferred_element_type=jnp.float32)                   # (TQ, hsp)
        # Normalize after the small PV matmul instead of on the (TQ, T) matrix.
        outs.append(oh * pl.reciprocal(rowsum, approx=True))

    o_heads = jnp.concatenate(outs, axis=-1)        # (TQ, Cp), lane-aligned pieces
    out = jnp.dot(o_heads.astype(jnp.bfloat16), wp_ref[...],
                  preferred_element_type=jnp.float32) + bp_ref[...]
    o_ref[0] = out.astype(o_ref.dtype)


@functools.partial(jax.jit, static_argnames=("num_heads",))
def mhca_forward(x, inp, wk, wq, wv, wp_t, bp, *, num_heads=NUM_HEADS):
    B, T, C = x.shape
    hs = C // num_heads
    hsp = ((hs + 127) // 128) * 128      # lane-aligned padded head size (96 -> 128 real)
    Cp = num_heads * hsp
    TQ = 128 if T % 128 == 0 else T      # query tile (toy: whole sequence)
    assert T % TQ == 0

    # --- host-side weight prep: fold scale (f32), pad heads, fuse K|V, cast bf16 ---
    def pad_head_cols(w):                # (C, C) -> (C, Cp): pad each head's cols to hsp
        w3 = w.reshape(C, num_heads, hs)
        return jnp.pad(w3, ((0, 0), (0, 0), (0, hsp - hs))).reshape(C, Cp)

    wq_s = pad_head_cols(wq * (C ** -0.5))                                  # scale in f32
    wkv = jnp.concatenate([pad_head_cols(wk), pad_head_cols(wv)], axis=1)   # (C, 2Cp)
    wp3 = wp_t.reshape(num_heads, hs, C)
    wpp = jnp.pad(wp3, ((0, 0), (0, hsp - hs), (0, 0))).reshape(Cp, C)      # (Cp, C)

    x_b = x.astype(jnp.bfloat16)
    inp_b = inp.astype(jnp.bfloat16)
    wkv_b = wkv.astype(jnp.bfloat16)
    wq_b = wq_s.astype(jnp.bfloat16)
    wp_b = wpp.astype(jnp.bfloat16)
    bp_f = bp.astype(jnp.float32)

    kernel = functools.partial(_mhca_kernel, seq=T, tq=TQ, heads=num_heads, hsp=hsp)
    return pl.pallas_call(
        kernel,
        out_shape=jax.ShapeDtypeStruct((B, T, C), x.dtype),
        grid_spec=pltpu.PrefetchScalarGridSpec(
            num_scalar_prefetch=0,
            grid=(B, T // TQ),
            in_specs=[
                pl.BlockSpec((1, T, C), lambda b, qi: (b, 0, 0)),      # x: full seq (K/V src)
                pl.BlockSpec((1, TQ, C), lambda b, qi: (b, qi, 0)),    # input: query tile
                pl.BlockSpec((C, 2 * Cp), lambda b, qi: (0, 0)),       # fused padded Wk|Wv
                pl.BlockSpec((C, Cp), lambda b, qi: (0, 0)),           # padded, pre-scaled Wq
                pl.BlockSpec((Cp, C), lambda b, qi: (0, 0)),           # padded Wp
                pl.BlockSpec((1, C), lambda b, qi: (0, 0)),            # bias (f32)
            ],
            out_specs=pl.BlockSpec((1, TQ, C), lambda b, qi: (b, qi, 0)),
            scratch_shapes=[pltpu.VMEM((T, 2 * Cp), jnp.bfloat16)],    # per-batch K|V
        ),
        compiler_params=pltpu.CompilerParams(
            dimension_semantics=("parallel", "arbitrary"),
            vmem_limit_bytes=32 * 1024 * 1024,
        ),
    )(x_b, inp_b, wkv_b, wq_b, wp_b, bp_f)


def mhca_reference(x, inp, wk, wq, wv, wp_t, bp):
    """Pure-JAX f32 reference mirroring the PyTorch forward (eval mode)."""
    B, T, C = x.shape
    H, hs = NUM_HEADS, HEAD_SIZE
    k = x @ wk
    q = inp @ wq
    v = x @ wv
    tril = jnp.tril(jnp.ones((T, T), jnp.float32))
    outs = []
    for h in range(H):
        qh, kh, vh = (a[:, :, h * hs:(h + 1) * hs] for a in (q, k, v))
        wei = jnp.einsum("bqd,bkd->bqk", qh, kh) * (C ** -0.5)
        wei = jnp.where(tril[None] == 0, -jnp.inf, wei)
        wei = jax.nn.softmax(wei, axis=-1)
        outs.append(jnp.einsum("bqk,bkd->bqd", wei, vh))
    out = jnp.concatenate(outs, axis=-1)
    return out @ wp_t + bp[None]


if __name__ == "__main__":
    key = jax.random.PRNGKey(0)
    kx, ki, k1, k2, k3, k4, k5 = jax.random.split(key, 7)

    x = jax.random.normal(kx, (BATCH, SEQ, N_EMBED), jnp.float32)
    enc_input = jax.random.normal(ki, (BATCH, SEQ, N_EMBED), jnp.float32)

    # Deterministic synthetic parameters (already in "act @ W" orientation).
    s = 0.05
    wk = s * jax.random.normal(k1, (N_EMBED, N_EMBED), jnp.float32)    # concat of per-head Wk^T
    wq = s * jax.random.normal(k2, (N_EMBED, N_EMBED), jnp.float32)
    wv = s * jax.random.normal(k3, (N_EMBED, N_EMBED), jnp.float32)
    wp_t = s * jax.random.normal(k4, (N_EMBED, N_EMBED), jnp.float32)  # proj weight, transposed
    bp = s * jax.random.normal(k5, (1, N_EMBED), jnp.float32)          # proj bias

    out = jax.block_until_ready(mhca_forward(x, enc_input, wk, wq, wv, wp_t, bp))
    ref = mhca_reference(x, enc_input, wk, wq, wv, wp_t, bp)

    assert out.shape == (BATCH, SEQ, N_EMBED)
    # bf16 MXU operands + approx EUP reciprocal -> loosened tolerance vs f32 reference.
    assert jnp.allclose(out, ref, atol=2e-2, rtol=2e-2), "mismatch vs reference"
    print("KERNEL_OK")
</pallas_src>

<mosaic_0001>
module attributes {stable_mosaic.version = 11 : i64} {
  func.func @_mhca_kernel(%arg0: i32, %arg1: i32, %arg2: memref<1x8x32xbf16, #tpu.memory_space<vmem>>, %arg3: memref<1x8x32xbf16, #tpu.memory_space<vmem>>, %arg4: memref<32x1024xbf16, #tpu.memory_space<vmem>>, %arg5: memref<32x512xbf16, #tpu.memory_space<vmem>>, %arg6: memref<512x32xbf16, #tpu.memory_space<vmem>>, %arg7: memref<1x32xf32, #tpu.memory_space<vmem>>, %arg8: memref<1x8x32xf32, #tpu.memory_space<vmem>>, %arg9: memref<8x1024xbf16, #tpu.memory_space<vmem>>) attributes {dimension_semantics = [#tpu.dimension_semantics<parallel>, #tpu.dimension_semantics<arbitrary>], iteration_bounds = array<i64: 2, 1>, scalar_prefetch = 0 : i64, scratch_operands = 1 : i64, tpu.core_type = #tpu.core_type<tc>, window_params = [{transform_indices = @transform_0, window_bounds = array<i64: 1, 8, 32>}, {transform_indices = @transform_1, window_bounds = array<i64: 1, 8, 32>}, {pipeline_mode = #tpu.pipeline_mode<synchronous>, transform_indices = @transform_2, window_bounds = array<i64: 32, 1024>}, {pipeline_mode = #tpu.pipeline_mode<synchronous>, transform_indices = @transform_3, window_bounds = array<i64: 32, 512>}, {pipeline_mode = #tpu.pipeline_mode<synchronous>, transform_indices = @transform_4, window_bounds = array<i64: 512, 32>}, {pipeline_mode = #tpu.pipeline_mode<synchronous>, transform_indices = @transform_5, window_bounds = array<i64: 1, 32>}, {transform_indices = @transform_6, window_bounds = array<i64: 1, 8, 32>}]} {
    %c0_i32 = arith.constant 0 : i32
    %0 = arith.cmpi eq, %arg1, %c0_i32 : i32
    %1 = arith.extui %0 : i1 to i32
    %c0_i32_0 = arith.constant 0 : i32
    %2 = arith.cmpi ne, %1, %c0_i32_0 : i32
    scf.if %2 {
      %c0_40 = arith.constant 0 : index
      %c0_41 = arith.constant 0 : index
      %c0_42 = arith.constant 0 : index
      %95 = vector.load %arg2[%c0_40, %c0_41, %c0_42] : memref<1x8x32xbf16, #tpu.memory_space<vmem>>, vector<1x8x32xbf16>
      %96 = vector.shape_cast %95 : vector<1x8x32xbf16> to vector<8x32xbf16>
      %c0_43 = arith.constant 0 : index
      %c0_44 = arith.constant 0 : index
      %97 = vector.load %arg4[%c0_43, %c0_44] : memref<32x1024xbf16, #tpu.memory_space<vmem>>, vector<32x1024xbf16>
      %cst_45 = arith.constant dense<0.000000e+00> : vector<8x1024xf32>
      %98 = tpu.matmul %96, %97, %cst_45 {dimension_numbers = #tpu.dot_dimension_numbers<[1], [0], [0], [1], [0, 0, 1, 1], [], []>} : vector<8x32xbf16>, vector<32x1024xbf16>, vector<8x1024xf32> -> vector<8x1024xf32>
      %99 = arith.truncf %98 : vector<8x1024xf32> to vector<8x1024xbf16>
      %c0_46 = arith.constant 0 : index
      %c0_47 = arith.constant 0 : index
      %100 = vector.load %arg9[%c0_46, %c0_47] : memref<8x1024xbf16, #tpu.memory_space<vmem>>, vector<8x1024xbf16>
      tpu.vector_store %arg9[%c0_46, %c0_47], %99 {strides = array<i32>} : memref<8x1024xbf16, #tpu.memory_space<vmem>>, vector<8x1024xbf16>,
    } else {
    }
    %c0 = arith.constant 0 : index
    %c0_1 = arith.constant 0 : index
    %c0_2 = arith.constant 0 : index
    %3 = vector.load %arg3[%c0, %c0_1, %c0_2] : memref<1x8x32xbf16, #tpu.memory_space<vmem>>, vector<1x8x32xbf16>
    %4 = vector.shape_cast %3 : vector<1x8x32xbf16> to vector<8x32xbf16>
    %c0_3 = arith.constant 0 : index
    %c0_4 = arith.constant 0 : index
    %5 = vector.load %arg5[%c0_3, %c0_4] : memref<32x512xbf16, #tpu.memory_space<vmem>>, vector<32x512xbf16>
    %cst = arith.constant dense<0.000000e+00> : vector<8x512xf32>
    %6 = tpu.matmul %4, %5, %cst {dimension_numbers = #tpu.dot_dimension_numbers<[1], [0], [0], [1], [0, 0, 1, 1], [], []>} : vector<8x32xbf16>, vector<32x512xbf16>, vector<8x512xf32> -> vector<8x512xf32>
    %7 = arith.truncf %6 : vector<8x512xf32> to vector<8x512xbf16>
    %c8_i32 = arith.constant 8 : i32
    %8 = arith.muli %arg1, %c8_i32 : i32
    %9 = tpu.iota {dimensions = array<i32: 0>} : vector<8x8xi32>
    %10 = vector.broadcast %8 : i32 to vector<8x8xi32>
    %11 = arith.addi %10, %9 : vector<8x8xi32>
    %12 = tpu.iota {dimensions = array<i32: 1>} : vector<8x8xi32>
    %13 = arith.cmpi sle, %12, %11 : vector<8x8xi32>
    %cst_5 = arith.constant 0.000000e+00 : f32
    %cst_6 = arith.constant -1.000000e+30 : f32
    %14 = vector.broadcast %cst_5 : f32 to vector<8x8xf32>
    %15 = vector.broadcast %cst_6 : f32 to vector<8x8xf32>
    %16 = arith.select %13, %14, %15 : vector<8x8xi1>, vector<8x8xf32>
    %c0_7 = arith.constant 0 : index
    %c0_8 = arith.constant 0 : index
    %17 = vector.load %arg9[%c0_7, %c0_8] : memref<8x1024xbf16, #tpu.memory_space<vmem>>, vector<8x128xbf16>
    %c0_9 = arith.constant 0 : index
    %c512 = arith.constant 512 : index
    %18 = vector.load %arg9[%c0_9, %c512] : memref<8x1024xbf16, #tpu.memory_space<vmem>>, vector<8x128xbf16>
    %19 = vector.extract_strided_slice %7 {offsets = [0, 0], sizes = [8, 128], strides = [1, 1]} : vector<8x512xbf16> to vector<8x128xbf16>
    %cst_10 = arith.constant dense<0.000000e+00> : vector<8x8xf32>
    %20 = tpu.matmul %19, %17, %cst_10 {dimension_numbers = #tpu.dot_dimension_numbers<[1], [1], [0], [0], [0, 0, 1, 0], [], []>} : vector<8x128xbf16>, vector<8x128xbf16>, vector<8x8xf32> -> vector<8x8xf32>
    %21 = arith.addf %20, %16 : vector<8x8xf32>
    %cst_11 = arith.constant dense<0xFF800000> : vector<8xf32>
    %22 = vector.multi_reduction <maximumf>, %21, %cst_11 [1] : vector<8x8xf32> to vector<8xf32>
    %23 = vector.shape_cast %22 : vector<8xf32> to vector<8x1xf32>
    %24 = vector.broadcast %23 : vector<8x1xf32> to vector<8x8xf32>
    %25 = arith.subf %21, %24 : vector<8x8xf32>
    %26 = math.exp %25 : vector<8x8xf32>
    %cst_12 = arith.constant dense<0.000000e+00> : vector<8xf32>
    %27 = vector.multi_reduction <add>, %26, %cst_12 [1] : vector<8x8xf32> to vector<8xf32>
    %28 = vector.shape_cast %27 : vector<8xf32> to vector<8x1xf32>
    %29 = arith.truncf %26 : vector<8x8xf32> to vector<8x8xbf16>
    %cst_13 = arith.constant dense<0.000000e+00> : vector<8x128xf32>
    %30 = tpu.matmul %29, %18, %cst_13 {dimension_numbers = #tpu.dot_dimension_numbers<[1], [0], [0], [1], [0, 0, 1, 1], [], []>} : vector<8x8xbf16>, vector<8x128xbf16>, vector<8x128xf32> -> vector<8x128xf32>
    %31 = tpu.reciprocal %28 {approx = true} : vector<8x1xf32> -> vector<8x1xf32>
    %32 = vector.broadcast %31 : vector<8x1xf32> to vector<8x128xf32>
    %33 = arith.mulf %30, %32 : vector<8x128xf32>
    %c0_14 = arith.constant 0 : index
    %c128 = arith.constant 128 : index
    %34 = vector.load %arg9[%c0_14, %c128] : memref<8x1024xbf16, #tpu.memory_space<vmem>>, vector<8x128xbf16>
    %c0_15 = arith.constant 0 : index
    %c640 = arith.constant 640 : index
    %35 = vector.load %arg9[%c0_15, %c640] : memref<8x1024xbf16, #tpu.memory_space<vmem>>, vector<8x128xbf16>
    %36 = vector.extract_strided_slice %7 {offsets = [0, 128], sizes = [8, 128], strides = [1, 1]} : vector<8x512xbf16> to vector<8x128xbf16>
    %cst_16 = arith.constant dense<0.000000e+00> : vector<8x8xf32>
    %37 = tpu.matmul %36, %34, %cst_16 {dimension_numbers = #tpu.dot_dimension_numbers<[1], [1], [0], [0], [0, 0, 1, 0], [], []>} : vector<8x128xbf16>, vector<8x128xbf16>, vector<8x8xf32> -> vector<8x8xf32>
    %38 = arith.addf %37, %16 : vector<8x8xf32>
    %cst_17 = arith.constant dense<0xFF800000> : vector<8xf32>
    %39 = vector.multi_reduction <maximumf>, %38, %cst_17 [1] : vector<8x8xf32> to vector<8xf32>
    %40 = vector.shape_cast %39 : vector<8xf32> to vector<8x1xf32>
    %41 = vector.broadcast %40 : vector<8x1xf32> to vector<8x8xf32>
    %42 = arith.subf %38, %41 : vector<8x8xf32>
    %43 = math.exp %42 : vector<8x8xf32>
    %cst_18 = arith.constant dense<0.000000e+00> : vector<8xf32>
    %44 = vector.multi_reduction <add>, %43, %cst_18 [1] : vector<8x8xf32> to vector<8xf32>
    %45 = vector.shape_cast %44 : vector<8xf32> to vector<8x1xf32>
    %46 = arith.truncf %43 : vector<8x8xf32> to vector<8x8xbf16>
    %cst_19 = arith.constant dense<0.000000e+00> : vector<8x128xf32>
    %47 = tpu.matmul %46, %35, %cst_19 {dimension_numbers = #tpu.dot_dimension_numbers<[1], [0], [0], [1], [0, 0, 1, 1], [], []>} : vector<8x8xbf16>, vector<8x128xbf16>, vector<8x128xf32> -> vector<8x128xf32>
    %48 = tpu.reciprocal %45 {approx = true} : vector<8x1xf32> -> vector<8x1xf32>
    %49 = vector.broadcast %48 : vector<8x1xf32> to vector<8x128xf32>
    %50 = arith.mulf %47, %49 : vector<8x128xf32>
    %c0_20 = arith.constant 0 : index
    %c256 = arith.constant 256 : index
    %51 = vector.load %arg9[%c0_20, %c256] : memref<8x1024xbf16, #tpu.memory_space<vmem>>, vector<8x128xbf16>
    %c0_21 = arith.constant 0 : index
    %c768 = arith.constant 768 : index
    %52 = vector.load %arg9[%c0_21, %c768] : memref<8x1024xbf16, #tpu.memory_space<vmem>>, vector<8x128xbf16>
    %53 = vector.extract_strided_slice %7 {offsets = [0, 256], sizes = [8, 128], strides = [1, 1]} : vector<8x512xbf16> to vector<8x128xbf16>
    %cst_22 = arith.constant dense<0.000000e+00> : vector<8x8xf32>
    %54 = tpu.matmul %53, %51, %cst_22 {dimension_numbers = #tpu.dot_dimension_numbers<[1], [1], [0], [0], [0, 0, 1, 0], [], []>} : vector<8x128xbf16>, vector<8x128xbf16>, vector<8x8xf32> -> vector<8x8xf32>
    %55 = arith.addf %54, %16 : vector<8x8xf32>
    %cst_23 = arith.constant dense<0xFF800000> : vector<8xf32>
    %56 = vector.multi_reduction <maximumf>, %55, %cst_23 [1] : vector<8x8xf32> to vector<8xf32>
    %57 = vector.shape_cast %56 : vector<8xf32> to vector<8x1xf32>
    %58 = vector.broadcast %57 : vector<8x1xf32> to vector<8x8xf32>
    %59 = arith.subf %55, %58 : vector<8x8xf32>
    %60 = math.exp %59 : vector<8x8xf32>
    %cst_24 = arith.constant dense<0.000000e+00> : vector<8xf32>
    %61 = vector.multi_reduction <add>, %60, %cst_24 [1] : vector<8x8xf32> to vector<8xf32>
    %62 = vector.shape_cast %61 : vector<8xf32> to vector<8x1xf32>
    %63 = arith.truncf %60 : vector<8x8xf32> to vector<8x8xbf16>
    %cst_25 = arith.constant dense<0.000000e+00> : vector<8x128xf32>
    %64 = tpu.matmul %63, %52, %cst_25 {dimension_numbers = #tpu.dot_dimension_numbers<[1], [0], [0], [1], [0, 0, 1, 1], [], []>} : vector<8x8xbf16>, vector<8x128xbf16>, vector<8x128xf32> -> vector<8x128xf32>
    %65 = tpu.reciprocal %62 {approx = true} : vector<8x1xf32> -> vector<8x1xf32>
    %66 = vector.broadcast %65 : vector<8x1xf32> to vector<8x128xf32>
    %67 = arith.mulf %64, %66 : vector<8x128xf32>
    %c0_26 = arith.constant 0 : index
    %c384 = arith.constant 384 : index
    %68 = vector.load %arg9[%c0_26, %c384] : memref<8x1024xbf16, #tpu.memory_space<vmem>>, vector<8x128xbf16>
    %c0_27 = arith.constant 0 : index
    %c896 = arith.constant 896 : index
    %69 = vector.load %arg9[%c0_27, %c896] : memref<8x1024xbf16, #tpu.memory_space<vmem>>, vector<8x128xbf16>
    %70 = vector.extract_strided_slice %7 {offsets = [0, 384], sizes = [8, 128], strides = [1, 1]} : vector<8x512xbf16> to vector<8x128xbf16>
    %cst_28 = arith.constant dense<0.000000e+00> : vector<8x8xf32>
    %71 = tpu.matmul %70, %68, %cst_28 {dimension_numbers = #tpu.dot_dimension_numbers<[1], [1], [0], [0], [0, 0, 1, 0], [], []>} : vector<8x128xbf16>, vector<8x128xbf16>, vector<8x8xf32> -> vector<8x8xf32>
    %72 = arith.addf %71, %16 : vector<8x8xf32>
    %cst_29 = arith.constant dense<0xFF800000> : vector<8xf32>
    %73 = vector.multi_reduction <maximumf>, %72, %cst_29 [1] : vector<8x8xf32> to vector<8xf32>
    %74 = vector.shape_cast %73 : vector<8xf32> to vector<8x1xf32>
    %75 = vector.broadcast %74 : vector<8x1xf32> to vector<8x8xf32>
    %76 = arith.subf %72, %75 : vector<8x8xf32>
    %77 = math.exp %76 : vector<8x8xf32>
    %cst_30 = arith.constant dense<0.000000e+00> : vector<8xf32>
    %78 = vector.multi_reduction <add>, %77, %cst_30 [1] : vector<8x8xf32> to vector<8xf32>
    %79 = vector.shape_cast %78 : vector<8xf32> to vector<8x1xf32>
    %80 = arith.truncf %77 : vector<8x8xf32> to vector<8x8xbf16>
    %cst_31 = arith.constant dense<0.000000e+00> : vector<8x128xf32>
    %81 = tpu.matmul %80, %69, %cst_31 {dimension_numbers = #tpu.dot_dimension_numbers<[1], [0], [0], [1], [0, 0, 1, 1], [], []>} : vector<8x8xbf16>, vector<8x128xbf16>, vector<8x128xf32> -> vector<8x128xf32>
    %82 = tpu.reciprocal %79 {approx = true} : vector<8x1xf32> -> vector<8x1xf32>
    %83 = vector.broadcast %82 : vector<8x1xf32> to vector<8x128xf32>
    %84 = arith.mulf %81, %83 : vector<8x128xf32>
    %85 = tpu.concatenate %33, %50, %67, %84 in 1 : vector<8x128xf32>, vector<8x128xf32>, vector<8x128xf32>, vector<8x128xf32> -> vector<8x512xf32>
    %86 = arith.truncf %85 : vector<8x512xf32> to vector<8x512xbf16>
    %c0_32 = arith.constant 0 : index
    %c0_33 = arith.constant 0 : index
    %87 = vector.load %arg6[%c0_32, %c0_33] : memref<512x32xbf16, #tpu.memory_space<vmem>>, vector<512x32xbf16>
    %cst_34 = arith.constant dense<0.000000e+00> : vector<8x32xf32>
    %88 = tpu.matmul %86, %87, %cst_34 {dimension_numbers = #tpu.dot_dimension_numbers<[1], [0], [0], [1], [0, 0, 1, 1], [], []>} : vector<8x512xbf16>, vector<512x32xbf16>, vector<8x32xf32> -> vector<8x32xf32>
    %c0_35 = arith.constant 0 : index
    %c0_36 = arith.constant 0 : index
    %89 = vector.load %arg7[%c0_35, %c0_36] : memref<1x32xf32, #tpu.memory_space<vmem>>, vector<1x32xf32>
    %90 = vector.broadcast %89 : vector<1x32xf32> to vector<8x32xf32>
    %91 = arith.addf %88, %90 : vector<8x32xf32>
    %c0_37 = arith.constant 0 : index
    %c0_38 = arith.constant 0 : index
    %c0_39 = arith.constant 0 : index
    %92 = vector.load %arg8[%c0_37, %c0_38, %c0_39] : memref<1x8x32xf32, #tpu.memory_space<vmem>>, vector<1x8x32xf32>
    %93 = vector.shape_cast %92 : vector<1x8x32xf32> to vector<8x32xf32>
    %94 = vector.shape_cast %91 : vector<8x32xf32> to vector<1x8x32xf32>
    tpu.vector_store %arg8[%c0_37, %c0_38, %c0_39], %94 {strides = array<i32>} : memref<1x8x32xf32, #tpu.memory_space<vmem>>, vector<1x8x32xf32>,
    return
  }
  func.func @transform_0(%arg0: i32, %arg1: i32) -> (i32, i32, i32) {
    %c0_i32 = arith.constant 0 : i32
    %c0_i32_0 = arith.constant 0 : i32
    %c0_i32_1 = arith.constant 0 : i32
    return %arg0, %c0_i32, %c0_i32_0 : i32, i32, i32
  }
  func.func @transform_1(%arg0: i32, %arg1: i32) -> (i32, i32, i32) {
    %c0_i32 = arith.constant 0 : i32
    %c0_i32_0 = arith.constant 0 : i32
    return %arg0, %arg1, %c0_i32 : i32, i32, i32
  }
  func.func @transform_2(%arg0: i32, %arg1: i32) -> (i32, i32) {
    %c0_i32 = arith.constant 0 : i32
    %c0_i32_0 = arith.constant 0 : i32
    %c0_i32_1 = arith.constant 0 : i32
    return %c0_i32, %c0_i32_0 : i32, i32
  }
  func.func @transform_3(%arg0: i32, %arg1: i32) -> (i32, i32) {
    %c0_i32 = arith.constant 0 : i32
    %c0_i32_0 = arith.constant 0 : i32
    %c0_i32_1 = arith.constant 0 : i32
    return %c0_i32, %c0_i32_0 : i32, i32
  }
  func.func @transform_4(%arg0: i32, %arg1: i32) -> (i32, i32) {
    %c0_i32 = arith.constant 0 : i32
    %c0_i32_0 = arith.constant 0 : i32
    %c0_i32_1 = arith.constant 0 : i32
    return %c0_i32, %c0_i32_0 : i32, i32
  }
  func.func @transform_5(%arg0: i32, %arg1: i32) -> (i32, i32) {
    %c0_i32 = arith.constant 0 : i32
    %c0_i32_0 = arith.constant 0 : i32
    %c0_i32_1 = arith.constant 0 : i32
    return %c0_i32, %c0_i32_0 : i32, i32
  }
  func.func @transform_6(%arg0: i32, %arg1: i32) -> (i32, i32, i32) {
    %c0_i32 = arith.constant 0 : i32
    %c0_i32_0 = arith.constant 0 : i32
    return %arg0, %arg1, %c0_i32 : i32, i32, i32
  }
}

</mosaic_0001>

<llo_original>
// kernel: mhca_forward.1
$region0: #{mhca_forward.1}
  #allocation0 [shape = 'u32[]', space=smem, size = 0x4, offset = 0x4, fixed_abs, tag = 'smem constant byte address 0x4 - core index']
  #allocation1 [shape = 'u32[144,128]{1,0:T(1,128)}', space=vmem, size = 0x12000, scoped, tag = 'internal scratch']
  #allocation2 [shape = 'bf16[8,1024]{1,0:T(8,128)(2,1)}', space=vmem, size = 0x4000, scoped, tag = 'scratch operand']
  %s0 = inlined_call_operand.vmem [shape: bf16[2,8,32], index: 0, kind: input, shape index: {}]
  %s1 = inlined_call_operand.vmem [shape: bf16[2,8,32], index: 1, kind: input, shape index: {}]
  %s2 = inlined_call_operand.vmem [shape: bf16[32,1024], index: 2, kind: input, shape index: {}]
  %s3 = inlined_call_operand.vmem [shape: bf16[32,512], index: 3, kind: input, shape index: {}]
  %s4 = inlined_call_operand.vmem [shape: bf16[512,32], index: 4, kind: input, shape index: {}]
  %s5 = inlined_call_operand.vmem [shape: f32[1,32], index: 5, kind: input, shape index: {}]
  %s6 = inlined_call_operand.hbm [shape: f32[2,8,32], index: 6, kind: output, shape index: {}]
  %s7 = sld [smem:[#allocation0]]
  $region61: #{mhca_forward.1} parent=0
    _
  %s9 = ssub.s32 1, %s7
  %s10 = scalar_select 0, %s9, %s7
  $region1: #{mhca_forward.1} parent=0
    #allocation3 [shape = 'u8[8192]{0}', space=vmem, size = 0x2000, scoped, tag = 'output window, operand 0']
    #allocation4 [shape = 's32[2]{0}', space=sflag, size = 0x8, scoped, tag = 'scoped memory for mhca_forward.1']
    %11 = vsyncpa [#allocation4], 0
    %s12 = scalar_lea.sflag [#allocation4], 1
    %13 = vsyncpa %s12, 0
    loop: start=0, step=1, limit=4
    $region2: #{mhca_forward.1} parent=1 // loop_pre_header
      _
    $region3: #{mhca_forward.1} parent=1 // loop_header
      %s15 = sphi 0, %s19
      %p16 = scmp.ge.s32.totalorder %s15, 4
      %s22 = sphi 0, %s34
      %s23 = sphi 0, %s30
      %s24 = sphi 0, %s22
      %s25 = sphi 0, %s23
      %s26 = sphi 0, %s24
      %s27 = sphi 0, %s25
      %s37 = sphi 0, %s39
      %s40 = sphi 0, %s37
      %s41 = sphi 0, %s40
      %s57 = sphi 0, %s41
      %s65 = sphi 0, %s67
      %s68 = sphi 0, %s65
      %s69 = sphi 0, %s68
      %s85 = sphi 0, %s69
      %s89 = sphi 0, %s89
      %s91 = sphi 0, %s89
      %s92 = sphi 0, %s91
      %s106 = sphi 0, %s92
      %s110 = sphi 0, %s110
      %s112 = sphi 0, %s110
      %s113 = sphi 0, %s112
      %s127 = sphi 0, %s113
      %s131 = sphi 0, %s131
      %s133 = sphi 0, %s131
      %s134 = sphi 0, %s133
      %s148 = sphi 0, %s134
      %s152 = sphi 0, %s152
      %s154 = sphi 0, %s152
      %s155 = sphi 0, %s154
      %s169 = sphi 0, %s155
      %s177 = sphi 0, %s179
      %s180 = sphi 0, %s177
      %s181 = sphi 0, %s180
      %s197 = sphi 0, %s181
    $region4: #{mhca_forward.1} parent=1 // loop_header_branch
      %18 = sbr.rel (%p16) target = $region8
    $region5: #{mhca_forward.1} parent=1 // loop_body
      %s20 = ssub.s32 %s15, 1
      %s21 = ssub.s32 %s15, 2
      %s28 = sadd.s32 1, %s23
      %p29 = scmp.ge.s32.totalorder %s28, 1
      %s30 = scalar_select %p29, 0, %s28
      %s31 = sadd.s32 1, %s22
      %s32 = scalar_select %p29, %s31, %s22
      %p33 = scmp.ge.s32.totalorder %s32, 2
      %s34 = scalar_select %p33, 0, %s32
      %s35 = ssub.s32 %s22, %s34
      %p36 = scmp.eq.s32.totalorder %s35, 0
      %s38 = sadd.s32 %s37, 1
      %s39 = scalar_select %p36, %s37, %s38
      %p42 = pneg %p36
      %p43 = scmp.eq.s32.totalorder %s15, 1
      %p44 = por %p42, %p43
      %p45 = scmp.ne.s32.totalorder %s37, %s40
      %p46 = scmp.eq.s32.totalorder %s15, 0
      %p47 = por %p45, %p46
      %p48 = scmp.ne.s32.totalorder %s37, %s40
      %p49 = scmp.eq.s32.totalorder %s20, 1
      %p50 = por %p48, %p49
      %p51 = scmp.ne.s32.totalorder %s40, %s41
      %p52 = scmp.eq.s32.totalorder %s20, 0
      %p53 = por %p51, %p52
      %p54 = scmp.ne.s32.totalorder %s40, %s41
      %p55 = scmp.eq.s32.totalorder %s21, 1
      %p56 = por %p54, %p55
      %p58 = scmp.ne.s32.totalorder %s41, %s57
      %p59 = scmp.eq.s32.totalorder %s21, 0
      %p60 = por %p58, %p59
      %s61 = ssub.s32 %s22, %s34
      %s62 = ssub.s32 %s23, %s30
      %s63 = sor.u32 %s61, %s62
      %p64 = scmp.eq.s32.totalorder %s63, 0
      %s66 = sadd.s32 %s65, 1
      %s67 = scalar_select %p64, %s65, %s66
      %p70 = pneg %p64
      %p71 = scmp.eq.s32.totalorder %s15, 1
      %p72 = por %p70, %p71
      %p73 = scmp.ne.s32.totalorder %s65, %s68
      %p74 = scmp.eq.s32.totalorder %s15, 0
      %p75 = por %p73, %p74
      %p76 = scmp.ne.s32.totalorder %s65, %s68
      %p77 = scmp.eq.s32.totalorder %s20, 1
      %p78 = por %p76, %p77
      %p79 = scmp.ne.s32.totalorder %s68, %s69
      %p80 = scmp.eq.s32.totalorder %s20, 0
      %p81 = por %p79, %p80
      %p82 = scmp.ne.s32.totalorder %s68, %s69
      %p83 = scmp.eq.s32.totalorder %s21, 1
      %p84 = por %p82, %p83
      %p86 = scmp.ne.s32.totalorder %s69, %s85
      %p87 = scmp.eq.s32.totalorder %s21, 0
      %p88 = por %p86, %p87
      %s90 = sadd.s32 %s89, 1
      %p93 = scmp.eq.s32.totalorder %s15, 1
      %p94 = scmp.ne.s32.totalorder %s89, %s91
      %p95 = scmp.eq.s32.totalorder %s15, 0
      %p96 = por %p94, %p95
      %p97 = scmp.ne.s32.totalorder %s89, %s91
      %p98 = scmp.eq.s32.totalorder %s20, 1
      %p99 = por %p97, %p98
      %p100 = scmp.ne.s32.totalorder %s91, %s92
      %p101 = scmp.eq.s32.totalorder %s20, 0
      %p102 = por %p100, %p101
      %p103 = scmp.ne.s32.totalorder %s91, %s92
      %p104 = scmp.eq.s32.totalorder %s21, 1
      %p105 = por %p103, %p104
      %p107 = scmp.ne.s32.totalorder %s92, %s106
      %p108 = scmp.eq.s32.totalorder %s21, 0
      %p109 = por %p107, %p108
      %s111 = sadd.s32 %s110, 1
      %p114 = scmp.eq.s32.totalorder %s15, 1
      %p115 = scmp.ne.s32.totalorder %s110, %s112
      %p116 = scmp.eq.s32.totalorder %s15, 0
      %p117 = por %p115, %p116
      %p118 = scmp.ne.s32.totalorder %s110, %s112
      %p119 = scmp.eq.s32.totalorder %s20, 1
      %p120 = por %p118, %p119
      %p121 = scmp.ne.s32.totalorder %s112, %s113
      %p122 = scmp.eq.s32.totalorder %s20, 0
      %p123 = por %p121, %p122
      %p124 = scmp.ne.s32.totalorder %s112, %s113
      %p125 = scmp.eq.s32.totalorder %s21, 1
      %p126 = por %p124, %p125
      %p128 = scmp.ne.s32.totalorder %s113, %s127
      %p129 = scmp.eq.s32.totalorder %s21, 0
      %p130 = por %p128, %p129
      %s132 = sadd.s32 %s131, 1
      %p135 = scmp.eq.s32.totalorder %s15, 1
      %p136 = scmp.ne.s32.totalorder %s131, %s133
      %p137 = scmp.eq.s32.totalorder %s15, 0
      %p138 = por %p136, %p137
      %p139 = scmp.ne.s32.totalorder %s131, %s133
      %p140 = scmp.eq.s32.totalorder %s20, 1
      %p141 = por %p139, %p140
      %p142 = scmp.ne.s32.totalorder %s133, %s134
      %p143 = scmp.eq.s32.totalorder %s20, 0
      %p144 = por %p142, %p143
      %p145 = scmp.ne.s32.totalorder %s133, %s134
      %p146 = scmp.eq.s32.totalorder %s21, 1
      %p147 = por %p145, %p146
      %p149 = scmp.ne.s32.totalorder %s134, %s148
      %p150 = scmp.eq.s32.totalorder %s21, 0
      %p151 = por %p149, %p150
      %s153 = sadd.s32 %s152, 1
      %p156 = scmp.eq.s32.totalorder %s15, 1
      %p157 = scmp.ne.s32.totalorder %s152, %s154
      %p158 = scmp.eq.s32.totalorder %s15, 0
      %p159 = por %p157, %p158
      %p160 = scmp.ne.s32.totalorder %s152, %s154
      %p161 = scmp.eq.s32.totalorder %s20, 1
      %p162 = por %p160, %p161
      %p163 = scmp.ne.s32.totalorder %s154, %s155
      %p164 = scmp.eq.s32.totalorder %s20, 0
      %p165 = por %p163, %p164
      %p166 = scmp.ne.s32.totalorder %s154, %s155
      %p167 = scmp.eq.s32.totalorder %s21, 1
      %p168 = por %p166, %p167
      %p170 = scmp.ne.s32.totalorder %s155, %s169
      %p171 = scmp.eq.s32.totalorder %s21, 0
      %p172 = por %p170, %p171
      %s173 = ssub.s32 %s22, %s34
      %s174 = ssub.s32 %s23, %s30
      %s175 = sor.u32 %s173, %s174
      %p176 = scmp.eq.s32.totalorder %s175, 0
      %s178 = sadd.s32 %s177, 1
      %s179 = scalar_select %p176, %s177, %s178
      %p182 = pneg %p176
      %p183 = scmp.eq.s32.totalorder %s15, 1
      %p184 = por %p182, %p183
      %p185 = scmp.ne.s32.totalorder %s177, %s180
      %p186 = scmp.eq.s32.totalorder %s15, 0
      %p187 = por %p185, %p186
      %p188 = scmp.ne.s32.totalorder %s177, %s180
      %p189 = scmp.eq.s32.totalorder %s20, 1
      %p190 = por %p188, %p189
      %p191 = scmp.ne.s32.totalorder %s180, %s181
      %p192 = scmp.eq.s32.totalorder %s20, 0
      %p193 = por %p191, %p192
      %p194 = scmp.ne.s32.totalorder %s180, %s181
      %p195 = scmp.eq.s32.totalorder %s21, 1
      %p196 = por %p194, %p195
      %p198 = scmp.ne.s32.totalorder %s181, %s197
      %p199 = scmp.eq.s32.totalorder %s21, 0
      %p200 = por %p198, %p199
      %p201 = scmp.le.s32.totalorder 1, %s15
      %p202 = scmp.lt.s32.totalorder %s15, 3
      %p203 = pnand %p201, %p202
      %p204 = pneg %p203
      // Predicated region
      $region9: #{mhca_forward.1} parent=5 // pred_check
        _
      $region10: #{mhca_forward.1} parent=5 // pred_check_branch
        %206 = sbr.rel (%p203) target = $region12
      $region11: #{mhca_forward.1} parent=5 // pred_region
        %s207 = ssub.s32 %s15, 1
        // Predicated region
        $region13: #{mhca_forward.1} parent=11 // pred_check
          %p208 = pneg %p102
        $region14: #{mhca_forward.1} parent=11 // pred_check_branch
          %210 = sbr.rel (%p208) target = $region16
        $region15: #{mhca_forward.1} parent=11 // pred_region
          _
        $region16: #{mhca_forward.1} parent=11 // pred_fallthru
          _
        // Predicated region
        $region17: #{mhca_forward.1} parent=11 // pred_check
          %p211 = pneg %p123
        $region18: #{mhca_forward.1} parent=11 // pred_check_branch
          %213 = sbr.rel (%p211) target = $region20
        $region19: #{mhca_forward.1} parent=11 // pred_region
          _
        $region20: #{mhca_forward.1} parent=11 // pred_fallthru
          _
        // Predicated region
        $region21: #{mhca_forward.1} parent=11 // pred_check
          %p214 = pneg %p144
        $region22: #{mhca_forward.1} parent=11 // pred_check_branch
          %216 = sbr.rel (%p214) target = $region24
        $region23: #{mhca_forward.1} parent=11 // pred_region
          _
        $region24: #{mhca_forward.1} parent=11 // pred_fallthru
          _
        // Predicated region
        $region25: #{mhca_forward.1} parent=11 // pred_check
          %p217 = pneg %p165
        $region26: #{mhca_forward.1} parent=11 // pred_check_branch
          %219 = sbr.rel (%p217) target = $region28
        $region27: #{mhca_forward.1} parent=11 // pred_region
          _
        $region28: #{mhca_forward.1} parent=11 // pred_fallthru
          _
      $region12: #{mhca_forward.1} parent=5 // pred_fallthru
        _
      %p220 = scmp.lt.s32.totalorder %s15, 2
      // Predicated region
      $region29: #{mhca_forward.1} parent=5 // pred_check
        %p221 = pneg %p220
      $region30: #{mhca_forward.1} parent=5 // pred_check_branch
        %223 = sbr.rel (%p221) target = $region32
      $region31: #{mhca_forward.1} parent=5 // pred_region
        // Predicated region
        $region33: #{mhca_forward.1} parent=31 // pred_check
          %p224 = pneg %p47
        $region34: #{mhca_forward.1} parent=31 // pred_check_branch
          %226 = sbr.rel (%p224) target = $region36
        $region35: #{mhca_forward.1} parent=31 // pred_region
          %p227 = scmp.lt.s32.totalorder %s22, 1
          %s228 = scalar_select %p227, %s22, 1
          %s229 = smul.addr %s228, 4
          %s230 = scalar_lea.vmem %s0, %s229
        $region36: #{mhca_forward.1} parent=31 // pred_fallthru
          _
        // Predicated region
        $region37: #{mhca_forward.1} parent=31 // pred_check
          %p231 = pneg %p75
        $region38: #{mhca_forward.1} parent=31 // pred_check_branch
          %233 = sbr.rel (%p231) target = $region40
        $region39: #{mhca_forward.1} parent=31 // pred_region
          %p234 = scmp.lt.s32.totalorder %s22, 1
          %s235 = scalar_select %p234, %s22, 1
          %p236 = scmp.lt.s32.totalorder %s23, 0
          %s237 = scalar_select %p236, %s23, 0
          %s238 = sadd.s32 %s237, %s235
          %s239 = smul.addr %s238, 4
          %s240 = scalar_lea.vmem %s1, %s239
        $region40: #{mhca_forward.1} parent=31 // pred_fallthru
          _
      $region32: #{mhca_forward.1} parent=5 // pred_fallthru
        _
      %p241 = scmp.le.s32.totalorder 1, %s15
      %p242 = scmp.lt.s32.totalorder %s15, 3
      %p243 = pnand %p241, %p242
      %p244 = pneg %p243
      // Predicated region
      $region41: #{mhca_forward.1} parent=5 // pred_check
        _
      $region42: #{mhca_forward.1} parent=5 // pred_check_branch
        %246 = sbr.rel (%p243) target = $region44
      $region43: #{mhca_forward.1} parent=5 // pred_region
        %s247 = ssub.s32 %s15, 1
        %p248 = scmp.lt.s32.totalorder %s24, 1
        %s249 = scalar_select %p248, %s24, 1
        %s250 = smul.addr %s249, 4
        %s251 = scalar_lea.vmem %s0, %s250
        %p252 = pneg %p53
        %p253 = pneg %p50
        %p254 = scmp.lt.s32.totalorder %s24, 1
        %s255 = scalar_select %p254, %s24, 1
        %p256 = scmp.lt.s32.totalorder %s25, 0
        %s257 = scalar_select %p256, %s25, 0
        %s258 = sadd.s32 %s257, %s255
        %s259 = smul.addr %s258, 4
        %s260 = scalar_lea.vmem %s1, %s259
        %p261 = pneg %p81
        %p262 = pneg %p78
        %p263 = pneg %p102
        %p264 = pneg %p99
        %p265 = pneg %p123
        %p266 = pneg %p120
        %p267 = pneg %p144
        %p268 = pneg %p141
        %p269 = pneg %p165
        %p270 = pneg %p162
        %p271 = pneg %p193
        %p272 = pneg %p190
        %s273 = sand.u32 %s180, 1
        %s274 = scalar_lea.sflag [#allocation4], %s273
        %s275 = sand.u32 %s180, 1
        %s276 = smul.addr %s275, 8
        %s277 = scalar_lea.vmem [#allocation3], %s276
        %p278 = scmp.lt.s32.totalorder %s24, 1
        %s279 = scalar_select %p278, %s24, 1
        %s280 = smul.addr %s279, 4
        %s281 = scalar_lea.vmem %s0, %s280
        %p282 = scmp.lt.s32.totalorder %s24, 1
        %s283 = scalar_select %p282, %s24, 1
        %p284 = scmp.lt.s32.totalorder %s25, 0
        %s285 = scalar_select %p284, %s25, 0
        %s286 = sadd.s32 %s285, %s283
        %s287 = smul.addr %s286, 4
        %s288 = scalar_lea.vmem %s1, %s287
        %p290 = scmp.eq.s32.totalorder %s25, 0
        // Predicated region
        $region45: #{mhca_forward.1} parent=43 // pred_check
          %p291 = pneg %p290
        $region46: #{mhca_forward.1} parent=43 // pred_check_branch
          %293 = sbr.rel (%p291) target = $region48
        $region47: #{mhca_forward.1} parent=43 // pred_region
          %v294 = vld [vmem:[%s281] sm:$0xf]
          %v295 = vld [vmem:[%s2] sm:$0xff]
          %v296 = vld [vmem:[%s2 + $0x8] sm:$0xff]
          %v297 = vld [vmem:[%s2 + $0x10] sm:$0xff]
          %v298 = vld [vmem:[%s2 + $0x18] sm:$0xff]
          %v299 = vld [vmem:[%s2 + $0x20] sm:$0xff]
          %v300 = vld [vmem:[%s2 + $0x28] sm:$0xff]
          %v301 = vld [vmem:[%s2 + $0x30] sm:$0xff]
          %v302 = vld [vmem:[%s2 + $0x38] sm:$0xff]
          %v303 = vld [vmem:[%s2 + $0x40] sm:$0xff]
          %v304 = vld [vmem:[%s2 + $0x48] sm:$0xff]
          %v305 = vld [vmem:[%s2 + $0x50] sm:$0xff]
          %v306 = vld [vmem:[%s2 + $0x58] sm:$0xff]
          %v307 = vld [vmem:[%s2 + $0x60] sm:$0xff]
          %v308 = vld [vmem:[%s2 + $0x68] sm:$0xff]
          %v309 = vld [vmem:[%s2 + $0x70] sm:$0xff]
          %v310 = vld [vmem:[%s2 + $0x78] sm:$0xff]
          %v327 = vunpack.c.l.b16 %v295
          %v328 = vunpack.c.h.b16 %v295
          %v329 = vunpack.c.l.b16 %v296
          %v330 = vunpack.c.h.b16 %v296
          %v331 = vunpack.c.l.b16 %v297
          %v332 = vunpack.c.h.b16 %v297
          %v333 = vunpack.c.l.b16 %v298
          %v334 = vunpack.c.h.b16 %v298
          %v335 = vunpack.c.l.b16 %v299
          %v336 = vunpack.c.h.b16 %v299
          %v337 = vunpack.c.l.b16 %v300
          %v338 = vunpack.c.h.b16 %v300
          %v339 = vunpack.c.l.b16 %v301
          %v340 = vunpack.c.h.b16 %v301
          %v341 = vunpack.c.l.b16 %v302
          %v342 = vunpack.c.h.b16 %v302
          %v343 = vunpack.c.l.b16 %v303
          %v344 = vunpack.c.h.b16 %v303
          %v345 = vunpack.c.l.b16 %v304
          %v346 = vunpack.c.h.b16 %v304
          %v347 = vunpack.c.l.b16 %v305
          %v348 = vunpack.c.h.b16 %v305
          %v349 = vunpack.c.l.b16 %v306
          %v350 = vunpack.c.h.b16 %v306
          %v351 = vunpack.c.l.b16 %v307
          %v352 = vunpack.c.h.b16 %v307
          %v353 = vunpack.c.l.b16 %v308
          %v354 = vunpack.c.h.b16 %v308
          %v355 = vunpack.c.l.b16 %v309
          %v356 = vunpack.c.h.b16 %v309
          %v357 = vunpack.c.l.b16 %v310
          %v358 = vunpack.c.h.b16 %v310
          %v359 = vpack.c.b16 %v335, %v327
          %v360 = vpack.c.b16 %v336, %v328
          %v361 = vpack.c.b16 %v337, %v329
          %v362 = vpack.c.b16 %v338, %v330
          %v363 = vpack.c.b16 %v339, %v331
          %v364 = vpack.c.b16 %v340, %v332
          %v365 = vpack.c.b16 %v341, %v333
          %v366 = vpack.c.b16 %v342, %v334
          %v367 = vpack.c.b16 %v351, %v343
          %v368 = vpack.c.b16 %v352, %v344
          %v369 = vpack.c.b16 %v353, %v345
          %v370 = vpack.c.b16 %v354, %v346
          %v371 = vpack.c.b16 %v355, %v347
          %v372 = vpack.c.b16 %v356, %v348
          %v373 = vpack.c.b16 %v357, %v349
          %v374 = vpack.c.b16 %v358, %v350
          %vm391 = vcmask 261120
          %v393 = vsel %vm391, %v294, 0
          %395 = vmatprep.subr.bf16.mxu0 %v360
          %396 = vmatpush1.bf16.msra.mxu0 %v359
          %397 = vmatprep.subr.bf16.mxu0 %v368
          %398 = vmatpush1.bf16.msra.mxu0 %v367
          %399 = vmatprep.subr.bf16.mxu0 0
          %400 = vmatpush1.bf16.msra.mxu0 0
          %401 = vmatprep.subr.bf16.mxu0 0
          %402 = vmatpush1.bf16.msra.mxu0 0
          %403 = vmatprep.subr.bf16.mxu0 0
          %404 = vmatpush1.bf16.msra.mxu0 0
          %405 = vmatprep.subr.bf16.mxu0 0
          %406 = vmatpush1.bf16.msra.mxu0 0
          %407 = vmatprep.subr.bf16.mxu0 0
          %408 = vmatpush1.bf16.msra.mxu0 0
          %409 = vmatprep.subr.bf16.mxu0 0
          %410 = vmatpush1.bf16.msra.mxu0 0
          %411 = vmatprep.subr.bf16.mxu0 0
          %412 = vmatpush1.bf16.msra.mxu0 0
          %413 = vmatprep.subr.bf16.mxu0 0
          %414 = vmatpush1.bf16.msra.mxu0 0
          %415 = vmatprep.subr.bf16.mxu0 0
          %416 = vmatpush1.bf16.msra.mxu0 0
          %417 = vmatprep.subr.bf16.mxu0 0
          %418 = vmatpush1.bf16.msra.mxu0 0
          %419 = vmatprep.subr.bf16.mxu0 0
          %420 = vmatpush1.bf16.msra.mxu0 0
          %421 = vmatprep.subr.bf16.mxu0 0
          %422 = vmatpush1.bf16.msra.mxu0 0
          %423 = vmatprep.subr.bf16.mxu0 0
          %424 = vmatpush1.bf16.msra.mxu0 0
          %425 = vmatprep.subr.bf16.mxu0 0
          %426 = vmatpush1.bf16.msra.mxu0 0
          %427 = vmatprep.mubr.bf16.mxu0 0
          %428 = vmatmul.mubr.bf16.gmra.mrb[0].mxu0 %v393
          %v429 = vpop.f32.mrb[0].mxu0
          %v430 = vadd.f32 0.0, %v429
          %v431 = vpop.f32.mrb[0].mxu0
          %v432 = vadd.f32 0.0, %v431
          %v433 = vpop.f32.mrb[0].mxu0
          %v434 = vpop.f32.mrb[0].mxu0
          %435 = vdwg.mxu0
          %436 = vmatprep.subr.bf16.mxu0 %v362
          %437 = vmatpush1.bf16.msra.mxu0 %v361
          %438 = vmatprep.subr.bf16.mxu0 %v370
          %439 = vmatpush1.bf16.msra.mxu0 %v369
          %440 = vmatprep.subr.bf16.mxu0 0
          %441 = vmatpush1.bf16.msra.mxu0 0
          %442 = vmatprep.subr.bf16.mxu0 0
          %443 = vmatpush1.bf16.msra.mxu0 0
          %444 = vmatprep.subr.bf16.mxu0 0
          %445 = vmatpush1.bf16.msra.mxu0 0
          %446 = vmatprep.subr.bf16.mxu0 0
          %447 = vmatpush1.bf16.msra.mxu0 0
          %448 = vmatprep.subr.bf16.mxu0 0
          %449 = vmatpush1.bf16.msra.mxu0 0
          %450 = vmatprep.subr.bf16.mxu0 0
          %451 = vmatpush1.bf16.msra.mxu0 0
          %452 = vmatprep.subr.bf16.mxu0 0
          %453 = vmatpush1.bf16.msra.mxu0 0
          %454 = vmatprep.subr.bf16.mxu0 0
          %455 = vmatpush1.bf16.msra.mxu0 0
          %456 = vmatprep.subr.bf16.mxu0 0
          %457 = vmatpush1.bf16.msra.mxu0 0
          %458 = vmatprep.subr.bf16.mxu0 0
          %459 = vmatpush1.bf16.msra.mxu0 0
          %460 = vmatprep.subr.bf16.mxu0 0
          %461 = vmatpush1.bf16.msra.mxu0 0
          %462 = vmatprep.subr.bf16.mxu0 0
          %463 = vmatpush1.bf16.msra.mxu0 0
          %464 = vmatprep.subr.bf16.mxu0 0
          %465 = vmatpush1.bf16.msra.mxu0 0
          %466 = vmatprep.subr.bf16.mxu0 0
          %467 = vmatpush1.bf16.msra.mxu0 0
          %468 = vmatprep.mubr.bf16.mxu0 0
          %469 = vmatmul.mubr.bf16.gmra.mrb[0].mxu0 %v393
          %v470 = vpop.f32.mrb[0].mxu0
          %v471 = vadd.f32 0.0, %v470
          %v472 = vpop.f32.mrb[0].mxu0
          %v473 = vadd.f32 0.0, %v472
          %v474 = vpop.f32.mrb[0].mxu0
          %v475 = vpop.f32.mrb[0].mxu0
          %476 = vdwg.mxu0
          %477 = vmatprep.subr.bf16.mxu0 %v364
          %478 = vmatpush1.bf16.msra.mxu0 %v363
          %479 = vmatprep.subr.bf16.mxu0 %v372
          %480 = vmatpush1.bf16.msra.mxu0 %v371
          %481 = vmatprep.subr.bf16.mxu0 0
          %482 = vmatpush1.bf16.msra.mxu0 0
          %483 = vmatprep.subr.bf16.mxu0 0
          %484 = vmatpush1.bf16.msra.mxu0 0
          %485 = vmatprep.subr.bf16.mxu0 0
          %486 = vmatpush1.bf16.msra.mxu0 0
          %487 = vmatprep.subr.bf16.mxu0 0
          %488 = vmatpush1.bf16.msra.mxu0 0
          %489 = vmatprep.subr.bf16.mxu0 0
          %490 = vmatpush1.bf16.msra.mxu0 0
          %491 = vmatprep.subr.bf16.mxu0 0
          %492 = vmatpush1.bf16.msra.mxu0 0
          %493 = vmatprep.subr.bf16.mxu0 0
          %494 = vmatpush1.bf16.msra.mxu0 0
          %495 = vmatprep.subr.bf16.mxu0 0
          %496 = vmatpush1.bf16.msra.mxu0 0
          %497 = vmatprep.subr.bf16.mxu0 0
          %498 = vmatpush1.bf16.msra.mxu0 0
          %499 = vmatprep.subr.bf16.mxu0 0
          %500 = vmatpush1.bf16.msra.mxu0 0
          %501 = vmatprep.subr.bf16.mxu0 0
          %502 = vmatpush1.bf16.msra.mxu0 0
          %503 = vmatprep.subr.bf16.mxu0 0
          %504 = vmatpush1.bf16.msra.mxu0 0
          %505 = vmatprep.subr.bf16.mxu0 0
          %506 = vmatpush1.bf16.msra.mxu0 0
          %507 = vmatprep.subr.bf16.mxu0 0
          %508 = vmatpush1.bf16.msra.mxu0 0
          %509 = vmatprep.mubr.bf16.mxu0 0
          %510 = vmatmul.mubr.bf16.gmra.mrb[0].mxu0 %v393
          %v511 = vpop.f32.mrb[0].mxu0
          %v512 = vadd.f32 0.0, %v511
          %v513 = vpop.f32.mrb[0].mxu0
          %v514 = vadd.f32 0.0, %v513
          %v515 = vpop.f32.mrb[0].mxu0
          %v516 = vpop.f32.mrb[0].mxu0
          %517 = vdwg.mxu0
          %518 = vmatprep.subr.bf16.mxu0 %v366
          %519 = vmatpush1.bf16.msra.mxu0 %v365
          %520 = vmatprep.subr.bf16.mxu0 %v374
          %521 = vmatpush1.bf16.msra.mxu0 %v373
          %522 = vmatprep.subr.bf16.mxu0 0
          %523 = vmatpush1.bf16.msra.mxu0 0
          %524 = vmatprep.subr.bf16.mxu0 0
          %525 = vmatpush1.bf16.msra.mxu0 0
          %526 = vmatprep.subr.bf16.mxu0 0
          %527 = vmatpush1.bf16.msra.mxu0 0
          %528 = vmatprep.subr.bf16.mxu0 0
          %529 = vmatpush1.bf16.msra.mxu0 0
          %530 = vmatprep.subr.bf16.mxu0 0
          %531 = vmatpush1.bf16.msra.mxu0 0
          %532 = vmatprep.subr.bf16.mxu0 0
          %533 = vmatpush1.bf16.msra.mxu0 0
          %534 = vmatprep.subr.bf16.mxu0 0
          %535 = vmatpush1.bf16.msra.mxu0 0
          %536 = vmatprep.subr.bf16.mxu0 0
          %537 = vmatpush1.bf16.msra.mxu0 0
          %538 = vmatprep.subr.bf16.mxu0 0
          %539 = vmatpush1.bf16.msra.mxu0 0
          %540 = vmatprep.subr.bf16.mxu0 0
          %541 = vmatpush1.bf16.msra.mxu0 0
          %542 = vmatprep.subr.bf16.mxu0 0
          %543 = vmatpush1.bf16.msra.mxu0 0
          %544 = vmatprep.subr.bf16.mxu0 0
          %545 = vmatpush1.bf16.msra.mxu0 0
          %546 = vmatprep.subr.bf16.mxu0 0
          %547 = vmatpush1.bf16.msra.mxu0 0
          %548 = vmatprep.subr.bf16.mxu0 0
          %549 = vmatpush1.bf16.msra.mxu0 0
          %550 = vmatprep.mubr.bf16.mxu0 0
          %551 = vmatmul.mubr.bf16.gmra.mrb[0].mxu0 %v393
          %v552 = vpop.f32.mrb[0].mxu0
          %v553 = vadd.f32 0.0, %v552
          %v554 = vpop.f32.mrb[0].mxu0
          %v555 = vadd.f32 0.0, %v554
          %v556 = vpop.f32.mrb[0].mxu0
          %v557 = vpop.f32.mrb[0].mxu0
          %558 = vdwg.mxu0
          %v559 = vpack.c.bf16 %v430, %v430
          %v560 = vpack.c.bf16 %v432, %v432
          %v561 = vpack.c.bf16 %v471, %v471
          %v562 = vpack.c.bf16 %v473, %v473
          %v563 = vpack.c.bf16 %v512, %v512
          %v564 = vpack.c.bf16 %v514, %v514
          %v565 = vpack.c.bf16 %v553, %v553
          %v566 = vpack.c.bf16 %v555, %v555
          %v575 = vunpack.c.l.b16 %v559
          %v576 = vunpack.c.l.b16 %v560
          %v577 = vunpack.c.l.b16 %v561
          %v578 = vunpack.c.l.b16 %v562
          %v579 = vunpack.c.l.b16 %v563
          %v580 = vunpack.c.l.b16 %v564
          %v581 = vunpack.c.l.b16 %v565
          %v582 = vunpack.c.l.b16 %v566
          %v583 = vpack.c.b16 %v576, %v575
          %v584 = vpack.c.b16 %v578, %v577
          %v585 = vpack.c.b16 %v580, %v579
          %v586 = vpack.c.b16 %v582, %v581
          %591 = vst [vmem:[#allocation2] sm:$0xff] %v583
          %592 = vst [vmem:[#allocation2 + $0x8] sm:$0xff] %v584
          %593 = vst [vmem:[#allocation2 + $0x10] sm:$0xff] %v585
          %594 = vst [vmem:[#allocation2 + $0x18] sm:$0xff] %v586
        $region48: #{mhca_forward.1} parent=43 // pred_fallthru
          _
        %v595 = vld [vmem:[%s288] sm:$0xf]
        %v596 = vld [vmem:[%s3] sm:$0xff]
        %v597 = vld [vmem:[%s3 + $0x8] sm:$0xff]
        %v598 = vld [vmem:[%s3 + $0x10] sm:$0xff]
        %v599 = vld [vmem:[%s3 + $0x18] sm:$0xff]
        %v600 = vld [vmem:[%s3 + $0x20] sm:$0xff]
        %v601 = vld [vmem:[%s3 + $0x28] sm:$0xff]
        %v602 = vld [vmem:[%s3 + $0x30] sm:$0xff]
        %v603 = vld [vmem:[%s3 + $0x38] sm:$0xff]
        %v612 = vunpack.c.l.b16 %v596
        %v613 = vunpack.c.h.b16 %v596
        %v614 = vunpack.c.l.b16 %v597
        %v615 = vunpack.c.h.b16 %v597
        %v616 = vunpack.c.l.b16 %v598
        %v617 = vunpack.c.h.b16 %v598
        %v618 = vunpack.c.l.b16 %v599
        %v619 = vunpack.c.h.b16 %v599
        %v620 = vunpack.c.l.b16 %v600
        %v621 = vunpack.c.h.b16 %v600
        %v622 = vunpack.c.l.b16 %v601
        %v623 = vunpack.c.h.b16 %v601
        %v624 = vunpack.c.l.b16 %v602
        %v625 = vunpack.c.h.b16 %v602
        %v626 = vunpack.c.l.b16 %v603
        %v627 = vunpack.c.h.b16 %v603
        %v628 = vpack.c.b16 %v616, %v612
        %v629 = vpack.c.b16 %v617, %v613
        %v630 = vpack.c.b16 %v618, %v614
        %v631 = vpack.c.b16 %v619, %v615
        %v632 = vpack.c.b16 %v624, %v620
        %v633 = vpack.c.b16 %v625, %v621
        %v634 = vpack.c.b16 %v626, %v622
        %v635 = vpack.c.b16 %v627, %v623
        %vm644 = vcmask 261120
        %v646 = vsel %vm644, %v595, 0
        %648 = vmatprep.subr.bf16.mxu0 %v629
        %649 = vmatpush1.bf16.msra.mxu0 %v628
        %650 = vmatprep.subr.bf16.mxu0 %v633
        %651 = vmatpush1.bf16.msra.mxu0 %v632
        %652 = vmatprep.subr.bf16.mxu0 0
        %653 = vmatpush1.bf16.msra.mxu0 0
        %654 = vmatprep.subr.bf16.mxu0 0
        %655 = vmatpush1.bf16.msra.mxu0 0
        %656 = vmatprep.subr.bf16.mxu0 0
        %657 = vmatpush1.bf16.msra.mxu0 0
        %658 = vmatprep.subr.bf16.mxu0 0
        %659 = vmatpush1.bf16.msra.mxu0 0
        %660 = vmatprep.subr.bf16.mxu0 0
        %661 = vmatpush1.bf16.msra.mxu0 0
        %662 = vmatprep.subr.bf16.mxu0 0
        %663 = vmatpush1.bf16.msra.mxu0 0
        %664 = vmatprep.subr.bf16.mxu0 0
        %665 = vmatpush1.bf16.msra.mxu0 0
        %666 = vmatprep.subr.bf16.mxu0 0
        %667 = vmatpush1.bf16.msra.mxu0 0
        %668 = vmatprep.subr.bf16.mxu0 0
        %669 = vmatpush1.bf16.msra.mxu0 0
        %670 = vmatprep.subr.bf16.mxu0 0
        %671 = vmatpush1.bf16.msra.mxu0 0
        %672 = vmatprep.subr.bf16.mxu0 0
        %673 = vmatpush1.bf16.msra.mxu0 0
        %674 = vmatprep.subr.bf16.mxu0 0
        %675 = vmatpush1.bf16.msra.mxu0 0
        %676 = vmatprep.subr.bf16.mxu0 0
        %677 = vmatpush1.bf16.msra.mxu0 0
        %678 = vmatprep.subr.bf16.mxu0 0
        %679 = vmatpush1.bf16.msra.mxu0 0
        %680 = vmatprep.mubr.bf16.mxu0 0
        %681 = vmatmul.mubr.bf16.gmra.mrb[0].mxu0 %v646
        %v682 = vpop.f32.mrb[0].mxu0
        %v683 = vadd.f32 0.0, %v682
        %v684 = vpop.f32.mrb[0].mxu0
        %v685 = vadd.f32 0.0, %v684
        %v686 = vpop.f32.mrb[0].mxu0
        %v687 = vpop.f32.mrb[0].mxu0
        %688 = vdwg.mxu0
        %689 = vmatprep.subr.bf16.mxu0 %v631
        %690 = vmatpush1.bf16.msra.mxu0 %v630
        %691 = vmatprep.subr.bf16.mxu0 %v635
        %692 = vmatpush1.bf16.msra.mxu0 %v634
        %693 = vmatprep.subr.bf16.mxu0 0
        %694 = vmatpush1.bf16.msra.mxu0 0
        %695 = vmatprep.subr.bf16.mxu0 0
        %696 = vmatpush1.bf16.msra.mxu0 0
        %697 = vmatprep.subr.bf16.mxu0 0
        %698 = vmatpush1.bf16.msra.mxu0 0
        %699 = vmatprep.subr.bf16.mxu0 0
        %700 = vmatpush1.bf16.msra.mxu0 0
        %701 = vmatprep.subr.bf16.mxu0 0
        %702 = vmatpush1.bf16.msra.mxu0 0
        %703 = vmatprep.subr.bf16.mxu0 0
        %704 = vmatpush1.bf16.msra.mxu0 0
        %705 = vmatprep.subr.bf16.mxu0 0
        %706 = vmatpush1.bf16.msra.mxu0 0
        %707 = vmatprep.subr.bf16.mxu0 0
        %708 = vmatpush1.bf16.msra.mxu0 0
        %709 = vmatprep.subr.bf16.mxu0 0
        %710 = vmatpush1.bf16.msra.mxu0 0
        %711 = vmatprep.subr.bf16.mxu0 0
        %712 = vmatpush1.bf16.msra.mxu0 0
        %713 = vmatprep.subr.bf16.mxu0 0
        %714 = vmatpush1.bf16.msra.mxu0 0
        %715 = vmatprep.subr.bf16.mxu0 0
        %716 = vmatpush1.bf16.msra.mxu0 0
        %717 = vmatprep.subr.bf16.mxu0 0
        %718 = vmatpush1.bf16.msra.mxu0 0
        %719 = vmatprep.subr.bf16.mxu0 0
        %720 = vmatpush1.bf16.msra.mxu0 0
        %721 = vmatprep.mubr.bf16.mxu0 0
        %722 = vmatmul.mubr.bf16.gmra.mrb[0].mxu0 %v646
        %v723 = vpop.f32.mrb[0].mxu0
        %v724 = vadd.f32 0.0, %v723
        %v725 = vpop.f32.mrb[0].mxu0
        %v726 = vadd.f32 0.0, %v725
        %v727 = vpop.f32.mrb[0].mxu0
        %v728 = vpop.f32.mrb[0].mxu0
        %729 = vdwg.mxu0
        %v730 = vpack.c.bf16 %v683, %v683
        %v731 = vpack.c.bf16 %v685, %v685
        %v732 = vpack.c.bf16 %v724, %v724
        %v733 = vpack.c.bf16 %v726, %v726
        %s734 = smul.u32 %s25, 8
        %v735 = vlaneseq
        %v736 = vshrl.u32 %v735, 7
        %v737 = vstv %s734
        %v738 = vadd.s32 %v737, %v736
        %v739 = vlaneseq
        %v740 = vand.u32 %v739, 127
        %vm741 = vcmp.le.s32.totalorder %v740, %v738
        %v742 = vsel %vm741, 0.0, -1e+30
        %v743 = vld [vmem:[#allocation2] sm:$0xf]
        %v744 = vld [vmem:[#allocation2 + $0x10] sm:$0xf]
        %745 = vmatprep.subr.bf16.mxu0 0
        %746 = vmatpush1.bf16.xpose.msra.mxu0 %v743
        %747 = vmatprep.subr.bf16.mxu0 0
        %748 = vmatpush1.bf16.xpose.msra.mxu0 0
        %749 = vmatprep.subr.bf16.mxu0 0
        %750 = vmatpush1.bf16.xpose.msra.mxu0 0
        %751 = vmatprep.subr.bf16.mxu0 0
        %752 = vmatpush1.bf16.xpose.msra.mxu0 0
        %753 = vmatprep.subr.bf16.mxu0 0
        %754 = vmatpush1.bf16.xpose.msra.mxu0 0
        %755 = vmatprep.subr.bf16.mxu0 0
        %756 = vmatpush1.bf16.xpose.msra.mxu0 0
        %757 = vmatprep.subr.bf16.mxu0 0
        %758 = vmatpush1.bf16.xpose.msra.mxu0 0
        %759 = vmatprep.subr.bf16.mxu0 0
        %760 = vmatpush1.bf16.xpose.msra.mxu0 0
        %761 = vmatprep.subr.bf16.mxu0 0
        %762 = vmatpush1.bf16.xpose.msra.mxu0 0
        %763 = vmatprep.subr.bf16.mxu0 0
        %764 = vmatpush1.bf16.xpose.msra.mxu0 0
        %765 = vmatprep.subr.bf16.mxu0 0
        %766 = vmatpush1.bf16.xpose.msra.mxu0 0
        %767 = vmatprep.subr.bf16.mxu0 0
        %768 = vmatpush1.bf16.xpose.msra.mxu0 0
        %769 = vmatprep.subr.bf16.mxu0 0
        %770 = vmatpush1.bf16.xpose.msra.mxu0 0
        %771 = vmatprep.subr.bf16.mxu0 0
        %772 = vmatpush1.bf16.xpose.msra.mxu0 0
        %773 = vmatprep.subr.bf16.mxu0 0
        %774 = vmatpush1.bf16.xpose.msra.mxu0 0
        %775 = vmatprep.subr.bf16.mxu0 0
        %776 = vmatpush1.bf16.xpose.msra.mxu0 0
        %777 = vmatprep.mubr.bf16.mxu0 0
        %778 = vmatmul.mubr.bf16.gmra.mrb[0].mxu0 %v730
        %v779 = vpop.f32.mrb[0].mxu0
        %v780 = vadd.f32 %v742, %v779
        %v781 = vpop.f32.mrb[0].mxu0
        %v782 = vpop.f32.mrb[0].mxu0
        %v783 = vpop.f32.mrb[0].mxu0
        %784 = vdwg.mxu0
        %vm785 = vcmask 64512
        %v786 = vsel %vm785, %v780, -inf
        %787 = vmax.xlane.f32.xlu0 %v786
        %v788 = vpop.xlane.xlu0 %787
        %v789 = vsub.f32 %v780, %v788
        %v790 = vmul.f32 %v789, 1.442695
        %v791 = vpow.pop %v790
        %v792 = vsel %vm785, %v791, 0.0
        %793 = vadd.xlane.f32.xlu0 %v792
        %v794 = vpop.xlane.xlu0 %793
        %v795 = vpack.c.bf16 %v791, %v791
        %v797 = vsel %vm785, %v795, 0
        %vm799 = vcmask 1043456
        %v801 = vsel %vm799, %v744, 0
        %803 = vmatprep.subr.bf16.mxu0 0
        %804 = vmatpush1.bf16.msra.mxu0 %v801
        %805 = vmatprep.subr.bf16.mxu0 0
        %806 = vmatpush1.bf16.msra.mxu0 0
        %807 = vmatprep.subr.bf16.mxu0 0
        %808 = vmatpush1.bf16.msra.mxu0 0
        %809 = vmatprep.subr.bf16.mxu0 0
        %810 = vmatpush1.bf16.msra.mxu0 0
        %811 = vmatprep.subr.bf16.mxu0 0
        %812 = vmatpush1.bf16.msra.mxu0 0
        %813 = vmatprep.subr.bf16.mxu0 0
        %814 = vmatpush1.bf16.msra.mxu0 0
        %815 = vmatprep.subr.bf16.mxu0 0
        %816 = vmatpush1.bf16.msra.mxu0 0
        %817 = vmatprep.subr.bf16.mxu0 0
        %818 = vmatpush1.bf16.msra.mxu0 0
        %819 = vmatprep.subr.bf16.mxu0 0
        %820 = vmatpush1.bf16.msra.mxu0 0
        %821 = vmatprep.subr.bf16.mxu0 0
        %822 = vmatpush1.bf16.msra.mxu0 0
        %823 = vmatprep.subr.bf16.mxu0 0
        %824 = vmatpush1.bf16.msra.mxu0 0
        %825 = vmatprep.subr.bf16.mxu0 0
        %826 = vmatpush1.bf16.msra.mxu0 0
        %827 = vmatprep.subr.bf16.mxu0 0
        %828 = vmatpush1.bf16.msra.mxu0 0
        %829 = vmatprep.subr.bf16.mxu0 0
        %830 = vmatpush1.bf16.msra.mxu0 0
        %831 = vmatprep.subr.bf16.mxu0 0
        %832 = vmatpush1.bf16.msra.mxu0 0
        %833 = vmatprep.subr.bf16.mxu0 0
        %834 = vmatpush1.bf16.msra.mxu0 0
        %835 = vmatprep.mubr.bf16.mxu0 0
        %836 = vmatmul.mubr.bf16.gmra.mrb[0].mxu0 %v797
        %v837 = vpop.f32.mrb[0].mxu0
        %v838 = vadd.f32 0.0, %v837
        %v839 = vpop.f32.mrb[0].mxu0
        %v840 = vpop.f32.mrb[0].mxu0
        %v841 = vpop.f32.mrb[0].mxu0
        %842 = vdwg.mxu0
        %v843 = vrcp.pop %v794
        %v844 = vmul.f32 %v838, %v843
        %v845 = vld [vmem:[#allocation2 + $0x4] sm:$0xf]
        %v846 = vld [vmem:[#allocation2 + $0x14] sm:$0xf]
        %847 = vmatprep.subr.bf16.mxu0 0
        %848 = vmatpush1.bf16.xpose.msra.mxu0 %v845
        %849 = vmatprep.subr.bf16.mxu0 0
        %850 = vmatpush1.bf16.xpose.msra.mxu0 0
        %851 = vmatprep.subr.bf16.mxu0 0
        %852 = vmatpush1.bf16.xpose.msra.mxu0 0
        %853 = vmatprep.subr.bf16.mxu0 0
        %854 = vmatpush1.bf16.xpose.msra.mxu0 0
        %855 = vmatprep.subr.bf16.mxu0 0
        %856 = vmatpush1.bf16.xpose.msra.mxu0 0
        %857 = vmatprep.subr.bf16.mxu0 0
        %858 = vmatpush1.bf16.xpose.msra.mxu0 0
        %859 = vmatprep.subr.bf16.mxu0 0
        %860 = vmatpush1.bf16.xpose.msra.mxu0 0
        %861 = vmatprep.subr.bf16.mxu0 0
        %862 = vmatpush1.bf16.xpose.msra.mxu0 0
        %863 = vmatprep.subr.bf16.mxu0 0
        %864 = vmatpush1.bf16.xpose.msra.mxu0 0
        %865 = vmatprep.subr.bf16.mxu0 0
        %866 = vmatpush1.bf16.xpose.msra.mxu0 0
        %867 = vmatprep.subr.bf16.mxu0 0
        %868 = vmatpush1.bf16.xpose.msra.mxu0 0
        %869 = vmatprep.subr.bf16.mxu0 0
        %870 = vmatpush1.bf16.xpose.msra.mxu0 0
        %871 = vmatprep.subr.bf16.mxu0 0
        %872 = vmatpush1.bf16.xpose.msra.mxu0 0
        %873 = vmatprep.subr.bf16.mxu0 0
        %874 = vmatpush1.bf16.xpose.msra.mxu0 0
        %875 = vmatprep.subr.bf16.mxu0 0
        %876 = vmatpush1.bf16.xpose.msra.mxu0 0
        %877 = vmatprep.subr.bf16.mxu0 0
        %878 = vmatpush1.bf16.xpose.msra.mxu0 0
        %879 = vmatprep.mubr.bf16.mxu0 0
        %880 = vmatmul.mubr.bf16.gmra.mrb[0].mxu0 %v731
        %v881 = vpop.f32.mrb[0].mxu0
        %v882 = vadd.f32 %v742, %v881
        %v883 = vpop.f32.mrb[0].mxu0
        %v884 = vpop.f32.mrb[0].mxu0
        %v885 = vpop.f32.mrb[0].mxu0
        %886 = vdwg.mxu0
        %v887 = vsel %vm785, %v882, -inf
        %888 = vmax.xlane.f32.xlu0 %v887
        %v889 = vpop.xlane.xlu0 %888
        %v890 = vsub.f32 %v882, %v889
        %v891 = vmul.f32 %v890, 1.442695
        %v892 = vpow.pop %v891
        %v893 = vsel %vm785, %v892, 0.0
        %894 = vadd.xlane.f32.xlu0 %v893
        %v895 = vpop.xlane.xlu0 %894
        %v896 = vpack.c.bf16 %v892, %v892
        %v898 = vsel %vm785, %v896, 0
        %v901 = vsel %vm799, %v846, 0
        %903 = vmatprep.subr.bf16.mxu0 0
        %904 = vmatpush1.bf16.msra.mxu0 %v901
        %905 = vmatprep.subr.bf16.mxu0 0
        %906 = vmatpush1.bf16.msra.mxu0 0
        %907 = vmatprep.subr.bf16.mxu0 0
        %908 = vmatpush1.bf16.msra.mxu0 0
        %909 = vmatprep.subr.bf16.mxu0 0
        %910 = vmatpush1.bf16.msra.mxu0 0
        %911 = vmatprep.subr.bf16.mxu0 0
        %912 = vmatpush1.bf16.msra.mxu0 0
        %913 = vmatprep.subr.bf16.mxu0 0
        %914 = vmatpush1.bf16.msra.mxu0 0
        %915 = vmatprep.subr.bf16.mxu0 0
        %916 = vmatpush1.bf16.msra.mxu0 0
        %917 = vmatprep.subr.bf16.mxu0 0
        %918 = vmatpush1.bf16.msra.mxu0 0
        %919 = vmatprep.subr.bf16.mxu0 0
        %920 = vmatpush1.bf16.msra.mxu0 0
        %921 = vmatprep.subr.bf16.mxu0 0
        %922 = vmatpush1.bf16.msra.mxu0 0
        %923 = vmatprep.subr.bf16.mxu0 0
        %924 = vmatpush1.bf16.msra.mxu0 0
        %925 = vmatprep.subr.bf16.mxu0 0
        %926 = vmatpush1.bf16.msra.mxu0 0
        %927 = vmatprep.subr.bf16.mxu0 0
        %928 = vmatpush1.bf16.msra.mxu0 0
        %929 = vmatprep.subr.bf16.mxu0 0
        %930 = vmatpush1.bf16.msra.mxu0 0
        %931 = vmatprep.subr.bf16.mxu0 0
        %932 = vmatpush1.bf16.msra.mxu0 0
        %933 = vmatprep.subr.bf16.mxu0 0
        %934 = vmatpush1.bf16.msra.mxu0 0
        %935 = vmatprep.mubr.bf16.mxu0 0
        %936 = vmatmul.mubr.bf16.gmra.mrb[0].mxu0 %v898
        %v937 = vpop.f32.mrb[0].mxu0
        %v938 = vadd.f32 0.0, %v937
        %v939 = vpop.f32.mrb[0].mxu0
        %v940 = vpop.f32.mrb[0].mxu0
        %v941 = vpop.f32.mrb[0].mxu0
        %942 = vdwg.mxu0
        %v943 = vrcp.pop %v895
        %v944 = vmul.f32 %v938, %v943
        %v945 = vld [vmem:[#allocation2 + $0x8] sm:$0xf]
        %v946 = vld [vmem:[#allocation2 + $0x18] sm:$0xf]
        %947 = vmatprep.subr.bf16.mxu0 0
        %948 = vmatpush1.bf16.xpose.msra.mxu0 %v945
        %949 = vmatprep.subr.bf16.mxu0 0
        %950 = vmatpush1.bf16.xpose.msra.mxu0 0
        %951 = vmatprep.subr.bf16.mxu0 0
        %952 = vmatpush1.bf16.xpose.msra.mxu0 0
        %953 = vmatprep.subr.bf16.mxu0 0
        %954 = vmatpush1.bf16.xpose.msra.mxu0 0
        %955 = vmatprep.subr.bf16.mxu0 0
        %956 = vmatpush1.bf16.xpose.msra.mxu0 0
        %957 = vmatprep.subr.bf16.mxu0 0
        %958 = vmatpush1.bf16.xpose.msra.mxu0 0
        %959 = vmatprep.subr.bf16.mxu0 0
        %960 = vmatpush1.bf16.xpose.msra.mxu0 0
        %961 = vmatprep.subr.bf16.mxu0 0
        %962 = vmatpush1.bf16.xpose.msra.mxu0 0
        %963 = vmatprep.subr.bf16.mxu0 0
        %964 = vmatpush1.bf16.xpose.msra.mxu0 0
        %965 = vmatprep.subr.bf16.mxu0 0
        %966 = vmatpush1.bf16.xpose.msra.mxu0 0
        %967 = vmatprep.subr.bf16.mxu0 0
        %968 = vmatpush1.bf16.xpose.msra.mxu0 0
        %969 = vmatprep.subr.bf16.mxu0 0
        %970 = vmatpush1.bf16.xpose.msra.mxu0 0
        %971 = vmatprep.subr.bf16.mxu0 0
        %972 = vmatpush1.bf16.xpose.msra.mxu0 0
        %973 = vmatprep.subr.bf16.mxu0 0
        %974 = vmatpush1.bf16.xpose.msra.mxu0 0
        %975 = vmatprep.subr.bf16.mxu0 0
        %976 = vmatpush1.bf16.xpose.msra.mxu0 0
        %977 = vmatprep.subr.bf16.mxu0 0
        %978 = vmatpush1.bf16.xpose.msra.mxu0 0
        %979 = vmatprep.mubr.bf16.mxu0 0
        %980 = vmatmul.mubr.bf16.gmra.mrb[0].mxu0 %v732
        %v981 = vpop.f32.mrb[0].mxu0
        %v982 = vadd.f32 %v742, %v981
        %v983 = vpop.f32.mrb[0].mxu0
        %v984 = vpop.f32.mrb[0].mxu0
        %v985 = vpop.f32.mrb[0].mxu0
        %986 = vdwg.mxu0
        %v987 = vsel %vm785, %v982, -inf
        %988 = vmax.xlane.f32.xlu0 %v987
        %v989 = vpop.xlane.xlu0 %988
        %v990 = vsub.f32 %v982, %v989
        %v991 = vmul.f32 %v990, 1.442695
        %v992 = vpow.pop %v991
        %v993 = vsel %vm785, %v992, 0.0
        %994 = vadd.xlane.f32.xlu0 %v993
        %v995 = vpop.xlane.xlu0 %994
        %v996 = vpack.c.bf16 %v992, %v992
        %v998 = vsel %vm785, %v996, 0
        %v1001 = vsel %vm799, %v946, 0
        %1003 = vmatprep.subr.bf16.mxu0 0
        %1004 = vmatpush1.bf16.msra.mxu0 %v1001
        %1005 = vmatprep.subr.bf16.mxu0 0
        %1006 = vmatpush1.bf16.msra.mxu0 0
        %1007 = vmatprep.subr.bf16.mxu0 0
        %1008 = vmatpush1.bf16.msra.mxu0 0
        %1009 = vmatprep.subr.bf16.mxu0 0
        %1010 = vmatpush1.bf16.msra.mxu0 0
        %1011 = vmatprep.subr.bf16.mxu0 0
        %1012 = vmatpush1.bf16.msra.mxu0 0
        %1013 = vmatprep.subr.bf16.mxu0 0
        %1014 = vmatpush1.bf16.msra.mxu0 0
        %1015 = vmatprep.subr.bf16.mxu0 0
        %1016 = vmatpush1.bf16.msra.mxu0 0
        %1017 = vmatprep.subr.bf16.mxu0 0
        %1018 = vmatpush1.bf16.msra.mxu0 0
        %1019 = vmatprep.subr.bf16.mxu0 0
        %1020 = vmatpush1.bf16.msra.mxu0 0
        %1021 = vmatprep.subr.bf16.mxu0 0
        %1022 = vmatpush1.bf16.msra.mxu0 0
        %1023 = vmatprep.subr.bf16.mxu0 0
        %1024 = vmatpush1.bf16.msra.mxu0 0
        %1025 = vmatprep.subr.bf16.mxu0 0
        %1026 = vmatpush1.bf16.msra.mxu0 0
        %1027 = vmatprep.subr.bf16.mxu0 0
        %1028 = vmatpush1.bf16.msra.mxu0 0
        %1029 = vmatprep.subr.bf16.mxu0 0
        %1030 = vmatpush1.bf16.msra.mxu0 0
        %1031 = vmatprep.subr.bf16.mxu0 0
        %1032 = vmatpush1.bf16.msra.mxu0 0
        %1033 = vmatprep.subr.bf16.mxu0 0
        %1034 = vmatpush1.bf16.msra.mxu0 0
        %1035 = vmatprep.mubr.bf16.mxu0 0
        %1036 = vmatmul.mubr.bf16.gmra.mrb[0].mxu0 %v998
        %v1037 = vpop.f32.mrb[0].mxu0
        %v1038 = vadd.f32 0.0, %v1037
        %v1039 = vpop.f32.mrb[0].mxu0
        %v1040 = vpop.f32.mrb[0].mxu0
        %v1041 = vpop.f32.mrb[0].mxu0
        %1042 = vdwg.mxu0
        %v1043 = vrcp.pop %v995
        %v1044 = vmul.f32 %v1038, %v1043
        %v1045 = vld [vmem:[#allocation2 + $0xc] sm:$0xf]
        %v1046 = vld [vmem:[#allocation2 + $0x1c] sm:$0xf]
        %1047 = vmatprep.subr.bf16.mxu0 0
        %1048 = vmatpush1.bf16.xpose.msra.mxu0 %v1045
        %1049 = vmatprep.subr.bf16.mxu0 0
        %1050 = vmatpush1.bf16.xpose.msra.mxu0 0
        %1051 = vmatprep.subr.bf16.mxu0 0
        %1052 = vmatpush1.bf16.xpose.msra.mxu0 0
        %1053 = vmatprep.subr.bf16.mxu0 0
        %1054 = vmatpush1.bf16.xpose.msra.mxu0 0
        %1055 = vmatprep.subr.bf16.mxu0 0
        %1056 = vmatpush1.bf16.xpose.msra.mxu0 0
        %1057 = vmatprep.subr.bf16.mxu0 0
        %1058 = vmatpush1.bf16.xpose.msra.mxu0 0
        %1059 = vmatprep.subr.bf16.mxu0 0
        %1060 = vmatpush1.bf16.xpose.msra.mxu0 0
        %1061 = vmatprep.subr.bf16.mxu0 0
        %1062 = vmatpush1.bf16.xpose.msra.mxu0 0
        %1063 = vmatprep.subr.bf16.mxu0 0
        %1064 = vmatpush1.bf16.xpose.msra.mxu0 0
        %1065 = vmatprep.subr.bf16.mxu0 0
        %1066 = vmatpush1.bf16.xpose.msra.mxu0 0
        %1067 = vmatprep.subr.bf16.mxu0 0
        %1068 = vmatpush1.bf16.xpose.msra.mxu0 0
        %1069 = vmatprep.subr.bf16.mxu0 0
        %1070 = vmatpush1.bf16.xpose.msra.mxu0 0
        %1071 = vmatprep.subr.bf16.mxu0 0
        %1072 = vmatpush1.bf16.xpose.msra.mxu0 0
        %1073 = vmatprep.subr.bf16.mxu0 0
        %1074 = vmatpush1.bf16.xpose.msra.mxu0 0
        %1075 = vmatprep.subr.bf16.mxu0 0
        %1076 = vmatpush1.bf16.xpose.msra.mxu0 0
        %1077 = vmatprep.subr.bf16.mxu0 0
        %1078 = vmatpush1.bf16.xpose.msra.mxu0 0
        %1079 = vmatprep.mubr.bf16.mxu0 0
        %1080 = vmatmul.mubr.bf16.gmra.mrb[0].mxu0 %v733
        %v1081 = vpop.f32.mrb[0].mxu0
        %v1082 = vadd.f32 %v742, %v1081
        %v1083 = vpop.f32.mrb[0].mxu0
        %v1084 = vpop.f32.mrb[0].mxu0
        %v1085 = vpop.f32.mrb[0].mxu0
        %1086 = vdwg.mxu0
        %v1087 = vsel %vm785, %v1082, -inf
        %1088 = vmax.xlane.f32.xlu0 %v1087
        %v1089 = vpop.xlane.xlu0 %1088
        %v1090 = vsub.f32 %v1082, %v1089
        %v1091 = vmul.f32 %v1090, 1.442695
        %v1092 = vpow.pop %v1091
        %v1093 = vsel %vm785, %v1092, 0.0
        %1094 = vadd.xlane.f32.xlu0 %v1093
        %v1095 = vpop.xlane.xlu0 %1094
        %v1096 = vpack.c.bf16 %v1092, %v1092
        %v1098 = vsel %vm785, %v1096, 0
        %v1101 = vsel %vm799, %v1046, 0
        %1103 = vmatprep.subr.bf16.mxu0 0
        %1104 = vmatpush1.bf16.msra.mxu0 %v1101
        %1105 = vmatprep.subr.bf16.mxu0 0
        %1106 = vmatpush1.bf16.msra.mxu0 0
        %1107 = vmatprep.subr.bf16.mxu0 0
        %1108 = vmatpush1.bf16.msra.mxu0 0
        %1109 = vmatprep.subr.bf16.mxu0 0
        %1110 = vmatpush1.bf16.msra.mxu0 0
        %1111 = vmatprep.subr.bf16.mxu0 0
        %1112 = vmatpush1.bf16.msra.mxu0 0
        %1113 = vmatprep.subr.bf16.mxu0 0
        %1114 = vmatpush1.bf16.msra.mxu0 0
        %1115 = vmatprep.subr.bf16.mxu0 0
        %1116 = vmatpush1.bf16.msra.mxu0 0
        %1117 = vmatprep.subr.bf16.mxu0 0
        %1118 = vmatpush1.bf16.msra.mxu0 0
        %1119 = vmatprep.subr.bf16.mxu0 0
        %1120 = vmatpush1.bf16.msra.mxu0 0
        %1121 = vmatprep.subr.bf16.mxu0 0
        %1122 = vmatpush1.bf16.msra.mxu0 0
        %1123 = vmatprep.subr.bf16.mxu0 0
        %1124 = vmatpush1.bf16.msra.mxu0 0
        %1125 = vmatprep.subr.bf16.mxu0 0
        %1126 = vmatpush1.bf16.msra.mxu0 0
        %1127 = vmatprep.subr.bf16.mxu0 0
        %1128 = vmatpush1.bf16.msra.mxu0 0
        %1129 = vmatprep.subr.bf16.mxu0 0
        %1130 = vmatpush1.bf16.msra.mxu0 0
        %1131 = vmatprep.subr.bf16.mxu0 0
        %1132 = vmatpush1.bf16.msra.mxu0 0
        %1133 = vmatprep.subr.bf16.mxu0 0
        %1134 = vmatpush1.bf16.msra.mxu0 0
        %1135 = vmatprep.mubr.bf16.mxu0 0
        %1136 = vmatmul.mubr.bf16.gmra.mrb[0].mxu0 %v1098
        %v1137 = vpop.f32.mrb[0].mxu0
        %v1138 = vadd.f32 0.0, %v1137
        %v1139 = vpop.f32.mrb[0].mxu0
        %v1140 = vpop.f32.mrb[0].mxu0
        %v1141 = vpop.f32.mrb[0].mxu0
        %1142 = vdwg.mxu0
        %v1143 = vrcp.pop %v1095
        %v1144 = vmul.f32 %v1138, %v1143
        %v1145 = vpack.c.bf16 %v844, %v844
        %v1146 = vpack.c.bf16 %v944, %v944
        %v1147 = vpack.c.bf16 %v1044, %v1044
        %v1148 = vpack.c.bf16 %v1144, %v1144
        %v1149 = vld [vmem:[%s4] sm:$0xf]
        %v1150 = vld [vmem:[%s4 + $0x4] sm:$0xf]
        %v1151 = vld [vmem:[%s4 + $0x8] sm:$0xf]
        %v1152 = vld [vmem:[%s4 + $0xc] sm:$0xf]
        %v1153 = vld [vmem:[%s4 + $0x10] sm:$0xf]
        %v1154 = vld [vmem:[%s4 + $0x14] sm:$0xf]
        %v1155 = vld [vmem:[%s4 + $0x18] sm:$0xf]
        %v1156 = vld [vmem:[%s4 + $0x1c] sm:$0xf]
        %v1157 = vld [vmem:[%s4 + $0x20] sm:$0xf]
        %v1158 = vld [vmem:[%s4 + $0x24] sm:$0xf]
        %v1159 = vld [vmem:[%s4 + $0x28] sm:$0xf]
        %v1160 = vld [vmem:[%s4 + $0x2c] sm:$0xf]
        %v1161 = vld [vmem:[%s4 + $0x30] sm:$0xf]
        %v1162 = vld [vmem:[%s4 + $0x34] sm:$0xf]
        %v1163 = vld [vmem:[%s4 + $0x38] sm:$0xf]
        %v1164 = vld [vmem:[%s4 + $0x3c] sm:$0xf]
        %v1165 = vld [vmem:[%s4 + $0x40] sm:$0xf]
        %v1166 = vld [vmem:[%s4 + $0x44] sm:$0xf]
        %v1167 = vld [vmem:[%s4 + $0x48] sm:$0xf]
        %v1168 = vld [vmem:[%s4 + $0x4c] sm:$0xf]
        %v1169 = vld [vmem:[%s4 + $0x50] sm:$0xf]
        %v1170 = vld [vmem:[%s4 + $0x54] sm:$0xf]
        %v1171 = vld [vmem:[%s4 + $0x58] sm:$0xf]
        %v1172 = vld [vmem:[%s4 + $0x5c] sm:$0xf]
        %v1173 = vld [vmem:[%s4 + $0x60] sm:$0xf]
        %v1174 = vld [vmem:[%s4 + $0x64] sm:$0xf]
        %v1175 = vld [vmem:[%s4 + $0x68] sm:$0xf]
        %v1176 = vld [vmem:[%s4 + $0x6c] sm:$0xf]
        %v1177 = vld [vmem:[%s4 + $0x70] sm:$0xf]
        %v1178 = vld [vmem:[%s4 + $0x74] sm:$0xf]
        %v1179 = vld [vmem:[%s4 + $0x78] sm:$0xf]
        %v1180 = vld [vmem:[%s4 + $0x7c] sm:$0xf]
        %v1181 = vld [vmem:[%s4 + $0x80] sm:$0xf]
        %v1182 = vld [vmem:[%s4 + $0x84] sm:$0xf]
        %v1183 = vld [vmem:[%s4 + $0x88] sm:$0xf]
        %v1184 = vld [vmem:[%s4 + $0x8c] sm:$0xf]
        %v1185 = vld [vmem:[%s4 + $0x90] sm:$0xf]
        %v1186 = vld [vmem:[%s4 + $0x94] sm:$0xf]
        %v1187 = vld [vmem:[%s4 + $0x98] sm:$0xf]
        %v1188 = vld [vmem:[%s4 + $0x9c] sm:$0xf]
        %v1189 = vld [vmem:[%s4 + $0xa0] sm:$0xf]
        %v1190 = vld [vmem:[%s4 + $0xa4] sm:$0xf]
        %v1191 = vld [vmem:[%s4 + $0xa8] sm:$0xf]
        %v1192 = vld [vmem:[%s4 + $0xac] sm:$0xf]
        %v1193 = vld [vmem:[%s4 + $0xb0] sm:$0xf]
        %v1194 = vld [vmem:[%s4 + $0xb4] sm:$0xf]
        %v1195 = vld [vmem:[%s4 + $0xb8] sm:$0xf]
        %v1196 = vld [vmem:[%s4 + $0xbc] sm:$0xf]
        %v1197 = vld [vmem:[%s4 + $0xc0] sm:$0xf]
        %v1198 = vld [vmem:[%s4 + $0xc4] sm:$0xf]
        %v1199 = vld [vmem:[%s4 + $0xc8] sm:$0xf]
        %v1200 = vld [vmem:[%s4 + $0xcc] sm:$0xf]
        %v1201 = vld [vmem:[%s4 + $0xd0] sm:$0xf]
        %v1202 = vld [vmem:[%s4 + $0xd4] sm:$0xf]
        %v1203 = vld [vmem:[%s4 + $0xd8] sm:$0xf]
        %v1204 = vld [vmem:[%s4 + $0xdc] sm:$0xf]
        %v1205 = vld [vmem:[%s4 + $0xe0] sm:$0xf]
        %v1206 = vld [vmem:[%s4 + $0xe4] sm:$0xf]
        %v1207 = vld [vmem:[%s4 + $0xe8] sm:$0xf]
        %v1208 = vld [vmem:[%s4 + $0xec] sm:$0xf]
        %v1209 = vld [vmem:[%s4 + $0xf0] sm:$0xf]
        %v1210 = vld [vmem:[%s4 + $0xf4] sm:$0xf]
        %v1211 = vld [vmem:[%s4 + $0xf8] sm:$0xf]
        %v1212 = vld [vmem:[%s4 + $0xfc] sm:$0xf]
        %v1213 = vld [vmem:[%s5] sm:$0x1]
        %v1215 = vlaneseq
        %v1216 = vshrl.u32 %v1215, 7
        %v1217 = vsub.s32 0, %v1216
        %v1218 = vrot.slane %v1213, %v1217
        %v1284 = vunpack.c.l.b16 %v1149
        %v1285 = vunpack.c.l.b16 %v1150
        %v1286 = vunpack.c.l.b16 %v1151
        %v1287 = vunpack.c.l.b16 %v1152
        %v1288 = vunpack.c.l.b16 %v1153
        %v1289 = vunpack.c.l.b16 %v1154
        %v1290 = vunpack.c.l.b16 %v1155
        %v1291 = vunpack.c.l.b16 %v1156
        %v1292 = vunpack.c.l.b16 %v1157
        %v1293 = vunpack.c.l.b16 %v1158
        %v1294 = vunpack.c.l.b16 %v1159
        %v1295 = vunpack.c.l.b16 %v1160
        %v1296 = vunpack.c.l.b16 %v1161
        %v1297 = vunpack.c.l.b16 %v1162
        %v1298 = vunpack.c.l.b16 %v1163
        %v1299 = vunpack.c.l.b16 %v1164
        %v1300 = vunpack.c.l.b16 %v1165
        %v1301 = vunpack.c.l.b16 %v1166
        %v1302 = vunpack.c.l.b16 %v1167
        %v1303 = vunpack.c.l.b16 %v1168
        %v1304 = vunpack.c.l.b16 %v1169
        %v1305 = vunpack.c.l.b16 %v1170
        %v1306 = vunpack.c.l.b16 %v1171
        %v1307 = vunpack.c.l.b16 %v1172
        %v1308 = vunpack.c.l.b16 %v1173
        %v1309 = vunpack.c.l.b16 %v1174
        %v1310 = vunpack.c.l.b16 %v1175
        %v1311 = vunpack.c.l.b16 %v1176
        %v1312 = vunpack.c.l.b16 %v1177
        %v1313 = vunpack.c.l.b16 %v1178
        %v1314 = vunpack.c.l.b16 %v1179
        %v1315 = vunpack.c.l.b16 %v1180
        %v1316 = vunpack.c.l.b16 %v1181
        %v1317 = vunpack.c.l.b16 %v1182
        %v1318 = vunpack.c.l.b16 %v1183
        %v1319 = vunpack.c.l.b16 %v1184
        %v1320 = vunpack.c.l.b16 %v1185
        %v1321 = vunpack.c.l.b16 %v1186
        %v1322 = vunpack.c.l.b16 %v1187
        %v1323 = vunpack.c.l.b16 %v1188
        %v1324 = vunpack.c.l.b16 %v1189
        %v1325 = vunpack.c.l.b16 %v1190
        %v1326 = vunpack.c.l.b16 %v1191
        %v1327 = vunpack.c.l.b16 %v1192
        %v1328 = vunpack.c.l.b16 %v1193
        %v1329 = vunpack.c.l.b16 %v1194
        %v1330 = vunpack.c.l.b16 %v1195
        %v1331 = vunpack.c.l.b16 %v1196
        %v1332 = vunpack.c.l.b16 %v1197
        %v1333 = vunpack.c.l.b16 %v1198
        %v1334 = vunpack.c.l.b16 %v1199
        %v1335 = vunpack.c.l.b16 %v1200
        %v1336 = vunpack.c.l.b16 %v1201
        %v1337 = vunpack.c.l.b16 %v1202
        %v1338 = vunpack.c.l.b16 %v1203
        %v1339 = vunpack.c.l.b16 %v1204
        %v1340 = vunpack.c.l.b16 %v1205
        %v1341 = vunpack.c.l.b16 %v1206
        %v1342 = vunpack.c.l.b16 %v1207
        %v1343 = vunpack.c.l.b16 %v1208
        %v1344 = vunpack.c.l.b16 %v1209
        %v1345 = vunpack.c.l.b16 %v1210
        %v1346 = vunpack.c.l.b16 %v1211
        %v1347 = vunpack.c.l.b16 %v1212
        %v1348 = vpack.c.b16 %v1285, %v1284
        %v1349 = vpack.c.b16 %v1287, %v1286
        %v1350 = vpack.c.b16 %v1289, %v1288
        %v1351 = vpack.c.b16 %v1291, %v1290
        %v1352 = vpack.c.b16 %v1293, %v1292
        %v1353 = vpack.c.b16 %v1295, %v1294
        %v1354 = vpack.c.b16 %v1297, %v1296
        %v1355 = vpack.c.b16 %v1299, %v1298
        %v1356 = vpack.c.b16 %v1301, %v1300
        %v1357 = vpack.c.b16 %v1303, %v1302
        %v1358 = vpack.c.b16 %v1305, %v1304
        %v1359 = vpack.c.b16 %v1307, %v1306
        %v1360 = vpack.c.b16 %v1309, %v1308
        %v1361 = vpack.c.b16 %v1311, %v1310
        %v1362 = vpack.c.b16 %v1313, %v1312
        %v1363 = vpack.c.b16 %v1315, %v1314
        %v1364 = vpack.c.b16 %v1317, %v1316
        %v1365 = vpack.c.b16 %v1319, %v1318
        %v1366 = vpack.c.b16 %v1321, %v1320
        %v1367 = vpack.c.b16 %v1323, %v1322
        %v1368 = vpack.c.b16 %v1325, %v1324
        %v1369 = vpack.c.b16 %v1327, %v1326
        %v1370 = vpack.c.b16 %v1329, %v1328
        %v1371 = vpack.c.b16 %v1331, %v1330
        %v1372 = vpack.c.b16 %v1333, %v1332
        %v1373 = vpack.c.b16 %v1335, %v1334
        %v1374 = vpack.c.b16 %v1337, %v1336
        %v1375 = vpack.c.b16 %v1339, %v1338
        %v1376 = vpack.c.b16 %v1341, %v1340
        %v1377 = vpack.c.b16 %v1343, %v1342
        %v1378 = vpack.c.b16 %v1345, %v1344
        %v1379 = vpack.c.b16 %v1347, %v1346
        %1412 = vmatprep.subr.bf16.mxu0 0
        %1413 = vmatpush1.bf16.msra.mxu0 %v1348
        %1414 = vmatprep.subr.bf16.mxu0 0
        %1415 = vmatpush1.bf16.msra.mxu0 %v1349
        %1416 = vmatprep.subr.bf16.mxu0 0
        %1417 = vmatpush1.bf16.msra.mxu0 %v1350
        %1418 = vmatprep.subr.bf16.mxu0 0
        %1419 = vmatpush1.bf16.msra.mxu0 %v1351
        %1420 = vmatprep.subr.bf16.mxu0 0
        %1421 = vmatpush1.bf16.msra.mxu0 %v1352
        %1422 = vmatprep.subr.bf16.mxu0 0
        %1423 = vmatpush1.bf16.msra.mxu0 %v1353
        %1424 = vmatprep.subr.bf16.mxu0 0
        %1425 = vmatpush1.bf16.msra.mxu0 %v1354
        %1426 = vmatprep.subr.bf16.mxu0 0
        %1427 = vmatpush1.bf16.msra.mxu0 %v1355
        %1428 = vmatprep.subr.bf16.mxu0 0
        %1429 = vmatpush1.bf16.msra.mxu0 %v1356
        %1430 = vmatprep.subr.bf16.mxu0 0
        %1431 = vmatpush1.bf16.msra.mxu0 %v1357
        %1432 = vmatprep.subr.bf16.mxu0 0
        %1433 = vmatpush1.bf16.msra.mxu0 %v1358
        %1434 = vmatprep.subr.bf16.mxu0 0
        %1435 = vmatpush1.bf16.msra.mxu0 %v1359
        %1436 = vmatprep.subr.bf16.mxu0 0
        %1437 = vmatpush1.bf16.msra.mxu0 %v1360
        %1438 = vmatprep.subr.bf16.mxu0 0
        %1439 = vmatpush1.bf16.msra.mxu0 %v1361
        %1440 = vmatprep.subr.bf16.mxu0 0
        %1441 = vmatpush1.bf16.msra.mxu0 %v1362
        %1442 = vmatprep.subr.bf16.mxu0 0
        %1443 = vmatpush1.bf16.msra.mxu0 %v1363
        %1444 = vmatprep.mubr.bf16.mxu0 %v1146
        %1445 = vmatmul.mubr.bf16.gmra.mrb[0].mxu0 %v1145
        %v1446 = vpop.f32.mrb[0].mxu0
        %v1447 = vadd.f32 %v1218, %v1446
        %v1448 = vpop.f32.mrb[0].mxu0
        %v1449 = vpop.f32.mrb[0].mxu0
        %v1450 = vpop.f32.mrb[0].mxu0
        %1451 = vdwg.mxu0
        %1452 = vmatprep.subr.bf16.mxu0 0
        %1453 = vmatpush1.bf16.msra.mxu0 %v1364
        %1454 = vmatprep.subr.bf16.mxu0 0
        %1455 = vmatpush1.bf16.msra.mxu0 %v1365
        %1456 = vmatprep.subr.bf16.mxu0 0
        %1457 = vmatpush1.bf16.msra.mxu0 %v1366
        %1458 = vmatprep.subr.bf16.mxu0 0
        %1459 = vmatpush1.bf16.msra.mxu0 %v1367
        %1460 = vmatprep.subr.bf16.mxu0 0
        %1461 = vmatpush1.bf16.msra.mxu0 %v1368
        %1462 = vmatprep.subr.bf16.mxu0 0
        %1463 = vmatpush1.bf16.msra.mxu0 %v1369
        %1464 = vmatprep.subr.bf16.mxu0 0
        %1465 = vmatpush1.bf16.msra.mxu0 %v1370
        %1466 = vmatprep.subr.bf16.mxu0 0
        %1467 = vmatpush1.bf16.msra.mxu0 %v1371
        %1468 = vmatprep.subr.bf16.mxu0 0
        %1469 = vmatpush1.bf16.msra.mxu0 %v1372
        %1470 = vmatprep.subr.bf16.mxu0 0
        %1471 = vmatpush1.bf16.msra.mxu0 %v1373
        %1472 = vmatprep.subr.bf16.mxu0 0
        %1473 = vmatpush1.bf16.msra.mxu0 %v1374
        %1474 = vmatprep.subr.bf16.mxu0 0
        %1475 = vmatpush1.bf16.msra.mxu0 %v1375
        %1476 = vmatprep.subr.bf16.mxu0 0
        %1477 = vmatpush1.bf16.msra.mxu0 %v1376
        %1478 = vmatprep.subr.bf16.mxu0 0
        %1479 = vmatpush1.bf16.msra.mxu0 %v1377
        %1480 = vmatprep.subr.bf16.mxu0 0
        %1481 = vmatpush1.bf16.msra.mxu0 %v1378
        %1482 = vmatprep.subr.bf16.mxu0 0
        %1483 = vmatpush1.bf16.msra.mxu0 %v1379
        %1484 = vmatprep.mubr.bf16.mxu0 %v1148
        %1485 = vmatmul.mubr.bf16.gmra.mrb[0].mxu0 %v1147
        %v1486 = vpop.f32.mrb[0].mxu0
        %v1487 = vadd.f32 %v1447, %v1486
        %v1488 = vpop.f32.mrb[0].mxu0
        %v1489 = vpop.f32.mrb[0].mxu0
        %v1490 = vpop.f32.mrb[0].mxu0
        %1491 = vdwg.mxu0
        %1492 = vst.msk [vmem:[%s277] sm:$0xff] %vm644, %v1487
        %s1493 = sand.u32 %s180, 1
        %s1494 = scalar_lea.sflag [#allocation4], %s1493
        %s1495 = sand.u32 %s180, 1
        %s1496 = smul.addr %s1495, 8
        %s1497 = scalar_lea.vmem [#allocation3], %s1496
        // Predicated region
        $region49: #{mhca_forward.1} parent=43 // pred_check
          %p1498 = pneg %p190
        $region50: #{mhca_forward.1} parent=43 // pred_check_branch
          %1500 = sbr.rel (%p1498) target = $region52
        $region51: #{mhca_forward.1} parent=43 // pred_region
          %s1502 = ssub.s32 128, 128
          %1503 = vsyncadd %s1494, %s1502
          %s1504 = sadd.s32 %s25, %s24
          %s1505 = smul.addr %s1504, 128
          %s1506 = scalar_lea.hbm %s6, %s1505
          %s1508 = sshll.u32 %s1497, 4
          %s1509 = int_to_ptr.vmem [resolvable:$true] %s1508
          %1511 = dma.vmem_to_hbm [thread:$0]  %s1509, 128, %s1506, %s1494
        $region52: #{mhca_forward.1} parent=43 // pred_fallthru
          _
      $region44: #{mhca_forward.1} parent=5 // pred_fallthru
        _
      %p1512 = scmp.le.s32.totalorder 2, %s15
      // Predicated region
      $region53: #{mhca_forward.1} parent=5 // pred_check
        %p1513 = pneg %p1512
      $region54: #{mhca_forward.1} parent=5 // pred_check_branch
        %1515 = sbr.rel (%p1513) target = $region56
      $region55: #{mhca_forward.1} parent=5 // pred_region
        %s1516 = ssub.s32 %s15, 2
        // Predicated region
        $region57: #{mhca_forward.1} parent=55 // pred_check
          %p1517 = pneg %p196
        $region58: #{mhca_forward.1} parent=55 // pred_check_branch
          %1519 = sbr.rel (%p1517) target = $region60
        $region59: #{mhca_forward.1} parent=55 // pred_region
          %s1520 = sand.u32 %s181, 1
          %s1521 = scalar_lea.sflag [#allocation4], %s1520
          %s1522 = sand.u32 %s181, 1
          %s1523 = smul.addr %s1522, 8
          %s1524 = scalar_lea.vmem [#allocation3], %s1523
          %1525 = dma.done %s1521, 128
        $region60: #{mhca_forward.1} parent=55 // pred_fallthru
          _
      $region56: #{mhca_forward.1} parent=5 // pred_fallthru
        _
    $region6: #{mhca_forward.1} parent=1 // loop_footer
      %s19 = sadd.s32 1, %s15
    $region7: #{mhca_forward.1} parent=1 // loop_footer_branch
      %14 = sbr.rel target = $region3
    $region8: #{mhca_forward.1} parent=1 // loop_exit
      _
    %1526 = vsyncpa [#allocation4], 1
    %s1527 = scalar_lea.sflag [#allocation4], 1
    %1528 = vsyncpa %s1527, 1

</llo_original>
